<compile_context>
chip_gen: v7x
topology: tpu7x:2x2x1
jax: 0.10.0
libtpu: 0.0.40
codegen_flags: <defaults>
</compile_context>

<pallas_src>
import numpy as np
import jax
import jax.numpy as jnp
from jax.experimental import pallas as pl
from jax.experimental.pallas import tpu as pltpu


def _round_up(n, m):
    return ((n + m - 1) // m) * m


def _cdiv(a, b):
    return (a + b - 1) // b


def actor_kernel(x_ref, w1_ref, b1_ref, w2_ref, b2_ref, w3_ref, b3_ref, o_ref):
    """One batch tile of the full Actor forward: 3 MXU matmuls + relu/relu/tanh."""
    x = x_ref[...]                                                        # [TB, Sp] bf16
    a1 = jnp.dot(x, w1_ref[...], preferred_element_type=jnp.float32)     # [TB, F1] f32 acc
    h1 = jnp.maximum(a1.astype(jnp.bfloat16) + b1_ref[...], 0)           # bias+ReLU in bf16
    a2 = jnp.dot(h1, w2_ref[...], preferred_element_type=jnp.float32)    # [TB, F2] f32 acc
    h2 = jnp.maximum(a2.astype(jnp.bfloat16) + b2_ref[...], 0)           # bias+ReLU in bf16
    a3 = jnp.dot(h2, w3_ref[...], preferred_element_type=jnp.float32)    # [TB, Ap] f32 acc
    o_ref[...] = jnp.tanh(a3 + b3_ref[...]).astype(o_ref.dtype)          # tanh in f32 (EUP)


def actor_forward(state, params, action_size, *, block_batch=2048):
    """Batched actor evaluation.  state: [B, state_size] f32 (or bf16)."""
    w1, b1, w2, b2, w3, b3 = params
    s_pad, f1p = w1.shape
    f2p = w2.shape[1]
    a_pad = w3.shape[1]

    batch, s_in = state.shape
    block_batch = max(16, _round_up(block_batch, 16))

    # bf16 activations => batch tiles must be multiples of 16 (16x128 packing).
    b16 = _round_up(batch, 16)
    # Pick the number of batch tiles:
    #  - big tiles amortize the per-grid-step overhead (~0.35 us),
    #  - >=2 tiles whenever there is enough work so the "parallel" batch axis
    #    can actually shard across both TensorCores on v7x,
    #  - tile derived from cdiv keeps padding waste < 16 rows per tile.
    n_tiles = max(1, _cdiv(b16, block_batch))
    if n_tiles == 1 and b16 >= 32:
        n_tiles = 2
    tb = _round_up(_cdiv(b16, n_tiles), 16)
    b_pad = tb * n_tiles

    # Zero-pad batch rows and state features; cast activations to bf16 here
    # (wrapper-side) so the kernel's x stream is half-width in HBM and VMEM.
    x = jnp.pad(state.astype(jnp.bfloat16),
                ((0, b_pad - batch), (0, s_pad - s_in)))

    grid = (n_tiles,)

    cost = pl.CostEstimate(
        flops=2 * b_pad * (s_pad * f1p + f1p * f2p + f2p * a_pad),
        transcendentals=b_pad * a_pad,
        bytes_accessed=(x.size * 2                      # bf16 activations in
                        + b_pad * a_pad * 4             # f32 out
                        + (w1.size + w2.size + w3.size) * 2
                        + (b1.size + b2.size) * 2 + b3.size * 4),
    )

    # Rough VMEM budget (double-buffered x/out + resident weights + f32/bf16
    # intermediates).  Only raise the scoped-VMEM limit if we'd exceed the
    # conservative 28 MiB default headroom (keeps v7x's 64 MiB physical safe).
    vmem_est = (2 * tb * s_pad * 2
                + 2 * tb * a_pad * 4
                + 2 * (w1.size + w2.size + w3.size) * 2
                + 2 * ((b1.size + b2.size) * 2 + b3.size * 4)
                + tb * (f1p + f2p) * 6)
    ckwargs = dict(dimension_semantics=("parallel",))     # megacore split on v7x
    if vmem_est > (28 << 20):
        ckwargs["vmem_limit_bytes"] = int(min(vmem_est + (8 << 20), 56 << 20))

    out = pl.pallas_call(
        actor_kernel,
        out_shape=jax.ShapeDtypeStruct((b_pad, a_pad), jnp.float32),
        grid=grid,
        in_specs=[
            pl.BlockSpec((tb, s_pad), lambda i: (i, 0)),   # x: tiled over batch
            pl.BlockSpec(w1.shape, lambda i: (0, 0)),      # weights/biases: resident
            pl.BlockSpec(b1.shape, lambda i: (0, 0)),
            pl.BlockSpec(w2.shape, lambda i: (0, 0)),
            pl.BlockSpec(b2.shape, lambda i: (0, 0)),
            pl.BlockSpec(w3.shape, lambda i: (0, 0)),
            pl.BlockSpec(b3.shape, lambda i: (0, 0)),
        ],
        out_specs=pl.BlockSpec((tb, a_pad), lambda i: (i, 0)),
        compiler_params=pltpu.CompilerParams(**ckwargs),
        cost_estimate=cost,
    )(x, w1, b1, w2, b2, w3, b3)

    return out[:batch, :action_size]


def init_actor_params(key, state_size, action_size, fc_units=(400, 300)):
    """Mirror PyTorch Actor.reset_parameters(), then pad/cast for the TPU kernel.

    PyTorch hidden_init uses weight.size(0) == out_features as "fan_in":
      fc1.W ~ U(+-1/sqrt(fc_units[0])), fc2.W ~ U(+-1/sqrt(fc_units[1])),
      fc3.W ~ U(+-0.003).  Biases keep nn.Linear default U(+-1/sqrt(in_features)).
    Weights are returned transposed to [in, out], zero-padded to multiples of 128
    (zero padding keeps the forward pass exactly equivalent), and cast to bf16.
    Hidden biases are bf16 (bf16 epilogue); the final bias stays f32 (tanh in f32).
    """
    f1, f2 = fc_units
    s_pad = _round_up(state_size, 128)
    f1_pad = _round_up(f1, 128)
    f2_pad = _round_up(f2, 128)
    a_pad = _round_up(action_size, 128)

    ks = jax.random.split(key, 6)
    lim1 = 1.0 / np.sqrt(f1)
    lim2 = 1.0 / np.sqrt(f2)
    lim3 = 0.003

    w1 = jax.random.uniform(ks[0], (state_size, f1), jnp.float32, -lim1, lim1)
    w2 = jax.random.uniform(ks[1], (f1, f2), jnp.float32, -lim2, lim2)
    w3 = jax.random.uniform(ks[2], (f2, action_size), jnp.float32, -lim3, lim3)

    b1 = jax.random.uniform(ks[3], (1, f1), jnp.float32,
                            -1.0 / np.sqrt(state_size), 1.0 / np.sqrt(state_size))
    b2 = jax.random.uniform(ks[4], (1, f2), jnp.float32,
                            -1.0 / np.sqrt(f1), 1.0 / np.sqrt(f1))
    b3 = jax.random.uniform(ks[5], (1, action_size), jnp.float32,
                            -1.0 / np.sqrt(f2), 1.0 / np.sqrt(f2))

    def pad2(a, rows, cols):
        return jnp.pad(a, ((0, rows - a.shape[0]), (0, cols - a.shape[1])))

    return (
        pad2(w1, s_pad, f1_pad).astype(jnp.bfloat16),
        pad2(b1, 1, f1_pad).astype(jnp.bfloat16),
        pad2(w2, f1_pad, f2_pad).astype(jnp.bfloat16),
        pad2(b2, 1, f2_pad).astype(jnp.bfloat16),
        pad2(w3, f2_pad, a_pad).astype(jnp.bfloat16),
        pad2(b3, 1, a_pad),
    )


def actor_reference(state, params, action_size):
    """Pure-JAX reference mirroring the kernel's bf16-operand / f32-accumulate
    matmuls and bf16 hidden epilogues."""
    w1, b1, w2, b2, w3, b3 = params
    s_pad = w1.shape[0]
    f32 = jnp.float32
    x = jnp.pad(state, ((0, 0), (0, s_pad - state.shape[1]))).astype(jnp.bfloat16)

    a1 = x.astype(f32) @ w1.astype(f32)
    h1 = jnp.maximum(a1.astype(jnp.bfloat16) + b1, 0)
    a2 = h1.astype(f32) @ w2.astype(f32)
    h2 = jnp.maximum(a2.astype(jnp.bfloat16) + b2, 0)
    a3 = h2.astype(f32) @ w3.astype(f32)
    out = jnp.tanh(a3 + b3.astype(f32))
    return out[:, :action_size]


if __name__ == "__main__":
    key = jax.random.PRNGKey(0)
    k_param, k_state = jax.random.split(key)

    # Small, module-consistent shapes (e.g. Tennis env: 24-dim state, 2-dim
    # action) with the module's default hidden widths [400, 300] (padded to
    # 512/384 lanes inside init).  batch=32 exercises the >=2-tile grid path.
    batch, state_size, action_size = 32, 24, 2
    fc_units = (400, 300)

    params = init_actor_params(k_param, state_size, action_size, fc_units)
    state = jax.random.normal(k_state, (batch, state_size), jnp.float32)

    out = actor_forward(state, params, action_size)
    out = jax.block_until_ready(out)
    assert out.shape == (batch, action_size)

    ref = actor_reference(state, params, action_size)
    np.testing.assert_allclose(np.asarray(out), np.asarray(ref), rtol=2e-2, atol=2e-2)

    print("KERNEL_OK")
</pallas_src>

<mosaic_0001>
module attributes {stable_mosaic.version = 11 : i64} {
  func.func @actor_kernel(%arg0: i32, %arg1: memref<16x128xbf16, #tpu.memory_space<vmem>>, %arg2: memref<128x512xbf16, #tpu.memory_space<vmem>>, %arg3: memref<1x512xbf16, #tpu.memory_space<vmem>>, %arg4: memref<512x384xbf16, #tpu.memory_space<vmem>>, %arg5: memref<1x384xbf16, #tpu.memory_space<vmem>>, %arg6: memref<384x128xbf16, #tpu.memory_space<vmem>>, %arg7: memref<1x128xf32, #tpu.memory_space<vmem>>, %arg8: memref<16x128xf32, #tpu.memory_space<vmem>>) attributes {dimension_semantics = [#tpu.dimension_semantics<parallel>], iteration_bounds = array<i64: 2>, scalar_prefetch = 0 : i64, scratch_operands = 0 : i64, tpu.core_type = #tpu.core_type<tc>, window_params = [{transform_indices = @transform_0, window_bounds = array<i64: 16, 128>}, {pipeline_mode = #tpu.pipeline_mode<synchronous>, transform_indices = @transform_1, window_bounds = array<i64: 128, 512>}, {pipeline_mode = #tpu.pipeline_mode<synchronous>, transform_indices = @transform_2, window_bounds = array<i64: 1, 512>}, {pipeline_mode = #tpu.pipeline_mode<synchronous>, transform_indices = @transform_3, window_bounds = array<i64: 512, 384>}, {pipeline_mode = #tpu.pipeline_mode<synchronous>, transform_indices = @transform_4, window_bounds = array<i64: 1, 384>}, {pipeline_mode = #tpu.pipeline_mode<synchronous>, transform_indices = @transform_5, window_bounds = array<i64: 384, 128>}, {pipeline_mode = #tpu.pipeline_mode<synchronous>, transform_indices = @transform_6, window_bounds = array<i64: 1, 128>}, {transform_indices = @transform_7, window_bounds = array<i64: 16, 128>}]} {
    %c0 = arith.constant 0 : index
    %c0_0 = arith.constant 0 : index
    %0 = vector.load %arg1[%c0, %c0_0] : memref<16x128xbf16, #tpu.memory_space<vmem>>, vector<16x128xbf16>
    %c0_1 = arith.constant 0 : index
    %c0_2 = arith.constant 0 : index
    %1 = vector.load %arg2[%c0_1, %c0_2] : memref<128x512xbf16, #tpu.memory_space<vmem>>, vector<128x512xbf16>
    %cst = arith.constant dense<0.000000e+00> : vector<16x512xf32>
    %2 = tpu.matmul %0, %1, %cst {dimension_numbers = #tpu.dot_dimension_numbers<[1], [0], [0], [1], [0, 0, 1, 1], [], []>} : vector<16x128xbf16>, vector<128x512xbf16>, vector<16x512xf32> -> vector<16x512xf32>
    %3 = arith.truncf %2 : vector<16x512xf32> to vector<16x512xbf16>
    %c0_3 = arith.constant 0 : index
    %c0_4 = arith.constant 0 : index
    %4 = vector.load %arg3[%c0_3, %c0_4] : memref<1x512xbf16, #tpu.memory_space<vmem>>, vector<1x512xbf16>
    %5 = vector.broadcast %4 : vector<1x512xbf16> to vector<16x512xbf16>
    %6 = arith.addf %3, %5 : vector<16x512xbf16>
    %cst_5 = arith.constant 0.000000e+00 : bf16
    %7 = vector.broadcast %cst_5 : bf16 to vector<16x512xbf16>
    %8 = arith.maximumf %6, %7 : vector<16x512xbf16>
    %c0_6 = arith.constant 0 : index
    %c0_7 = arith.constant 0 : index
    %9 = vector.load %arg4[%c0_6, %c0_7] : memref<512x384xbf16, #tpu.memory_space<vmem>>, vector<512x384xbf16>
    %cst_8 = arith.constant dense<0.000000e+00> : vector<16x384xf32>
    %10 = tpu.matmul %8, %9, %cst_8 {dimension_numbers = #tpu.dot_dimension_numbers<[1], [0], [0], [1], [0, 0, 1, 1], [], []>} : vector<16x512xbf16>, vector<512x384xbf16>, vector<16x384xf32> -> vector<16x384xf32>
    %11 = arith.truncf %10 : vector<16x384xf32> to vector<16x384xbf16>
    %c0_9 = arith.constant 0 : index
    %c0_10 = arith.constant 0 : index
    %12 = vector.load %arg5[%c0_9, %c0_10] : memref<1x384xbf16, #tpu.memory_space<vmem>>, vector<1x384xbf16>
    %13 = vector.broadcast %12 : vector<1x384xbf16> to vector<16x384xbf16>
    %14 = arith.addf %11, %13 : vector<16x384xbf16>
    %cst_11 = arith.constant 0.000000e+00 : bf16
    %15 = vector.broadcast %cst_11 : bf16 to vector<16x384xbf16>
    %16 = arith.maximumf %14, %15 : vector<16x384xbf16>
    %c0_12 = arith.constant 0 : index
    %c0_13 = arith.constant 0 : index
    %17 = vector.load %arg6[%c0_12, %c0_13] : memref<384x128xbf16, #tpu.memory_space<vmem>>, vector<384x128xbf16>
    %cst_14 = arith.constant dense<0.000000e+00> : vector<16x128xf32>
    %18 = tpu.matmul %16, %17, %cst_14 {dimension_numbers = #tpu.dot_dimension_numbers<[1], [0], [0], [1], [0, 0, 1, 1], [], []>} : vector<16x384xbf16>, vector<384x128xbf16>, vector<16x128xf32> -> vector<16x128xf32>
    %c0_15 = arith.constant 0 : index
    %c0_16 = arith.constant 0 : index
    %19 = vector.load %arg7[%c0_15, %c0_16] : memref<1x128xf32, #tpu.memory_space<vmem>>, vector<1x128xf32>
    %20 = vector.broadcast %19 : vector<1x128xf32> to vector<16x128xf32>
    %21 = arith.addf %18, %20 : vector<16x128xf32>
    %22 = math.tanh %21 : vector<16x128xf32>
    %c0_17 = arith.constant 0 : index
    %c0_18 = arith.constant 0 : index
    %23 = vector.load %arg8[%c0_17, %c0_18] : memref<16x128xf32, #tpu.memory_space<vmem>>, vector<16x128xf32>
    tpu.vector_store %arg8[%c0_17, %c0_18], %22 {strides = array<i32>} : memref<16x128xf32, #tpu.memory_space<vmem>>, vector<16x128xf32>,
    return
  }
  func.func @transform_0(%arg0: i32) -> (i32, i32) {
    %c0_i32 = arith.constant 0 : i32
    %c0_i32_0 = arith.constant 0 : i32
    return %arg0, %c0_i32 : i32, i32
  }
  func.func @transform_1(%arg0: i32) -> (i32, i32) {
    %c0_i32 = arith.constant 0 : i32
    %c0_i32_0 = arith.constant 0 : i32
    %c0_i32_1 = arith.constant 0 : i32
    return %c0_i32, %c0_i32_0 : i32, i32
  }
  func.func @transform_2(%arg0: i32) -> (i32, i32) {
    %c0_i32 = arith.constant 0 : i32
    %c0_i32_0 = arith.constant 0 : i32
    %c0_i32_1 = arith.constant 0 : i32
    return %c0_i32, %c0_i32_0 : i32, i32
  }
  func.func @transform_3(%arg0: i32) -> (i32, i32) {
    %c0_i32 = arith.constant 0 : i32
    %c0_i32_0 = arith.constant 0 : i32
    %c0_i32_1 = arith.constant 0 : i32
    return %c0_i32, %c0_i32_0 : i32, i32
  }
  func.func @transform_4(%arg0: i32) -> (i32, i32) {
    %c0_i32 = arith.constant 0 : i32
    %c0_i32_0 = arith.constant 0 : i32
    %c0_i32_1 = arith.constant 0 : i32
    return %c0_i32, %c0_i32_0 : i32, i32
  }
  func.func @transform_5(%arg0: i32) -> (i32, i32) {
    %c0_i32 = arith.constant 0 : i32
    %c0_i32_0 = arith.constant 0 : i32
    %c0_i32_1 = arith.constant 0 : i32
    return %c0_i32, %c0_i32_0 : i32, i32
  }
  func.func @transform_6(%arg0: i32) -> (i32, i32) {
    %c0_i32 = arith.constant 0 : i32
    %c0_i32_0 = arith.constant 0 : i32
    %c0_i32_1 = arith.constant 0 : i32
    return %c0_i32, %c0_i32_0 : i32, i32
  }
  func.func @transform_7(%arg0: i32) -> (i32, i32) {
    %c0_i32 = arith.constant 0 : i32
    %c0_i32_0 = arith.constant 0 : i32
    return %arg0, %c0_i32 : i32, i32
  }
}

</mosaic_0001>

<llo_original>
// kernel: tpu_custom_call.1
$region0: #{tpu_custom_call.1}
  #allocation0 [shape = 'u32[]', space=smem, size = 0x4, offset = 0x4, fixed_abs, tag = 'smem constant byte address 0x4 - core index']
  #allocation1 [shape = 'u32[144,128]{1,0:T(1,128)}', space=vmem, size = 0x12000, scoped, tag = 'internal scratch']
  %s0 = inlined_call_operand.hbm [shape: bf16[32,128], index: 0, kind: input, shape index: {}]
  %s1 = inlined_call_operand.hbm [shape: bf16[128,512], index: 1, kind: input, shape index: {}]
  %s2 = inlined_call_operand.vmem [shape: bf16[1,512], index: 2, kind: input, shape index: {}]
  %s3 = inlined_call_operand.hbm [shape: bf16[512,384], index: 3, kind: input, shape index: {}]
  %s4 = inlined_call_operand.vmem [shape: bf16[1,384], index: 4, kind: input, shape index: {}]
  %s5 = inlined_call_operand.hbm [shape: bf16[384,128], index: 5, kind: input, shape index: {}]
  %s6 = inlined_call_operand.vmem [shape: f32[1,128], index: 6, kind: input, shape index: {}]
  %s7 = inlined_call_operand.hbm [shape: f32[32,128], index: 7, kind: output, shape index: {}]
  %s8 = sld [smem:[#allocation0]]
  $region77: #{tpu_custom_call.1} parent=0
    _
  %s10 = ssub.s32 1, %s8
  %s11 = scalar_select 0, %s10, %s8
  $region1: #{tpu_custom_call.1} parent=0
    #allocation2 [shape = 'u8[8192]{0}', space=vmem, size = 0x2000, scoped, tag = 'input window, operand 0']
    #allocation3 [shape = 's32[2]{0}', space=sflag, size = 0x8, scoped, tag = 'scoped memory for tpu_custom_call.1']
    #allocation4 [shape = 's32[2]{0}', space=sflag, size = 0x8, scoped, tag = 'scoped memory for tpu_custom_call.1']
    #allocation5 [shape = 'u8[131072]{0}', space=vmem, size = 0x20000, scoped, tag = 'input window, operand 1, single buffered']
    #allocation6 [shape = 's32[1]{0}', space=sflag, size = 0x4, scoped, tag = 'scoped memory for tpu_custom_call.1']
    #allocation7 [shape = 'u8[393216]{0}', space=vmem, size = 0x60000, scoped, tag = 'input window, operand 3, single buffered']
    #allocation8 [shape = 'u8[98304]{0}', space=vmem, size = 0x18000, scoped, tag = 'input window, operand 5, single buffered']
    #allocation9 [shape = 's32[1]{0}', space=sflag, size = 0x4, scoped, tag = 'scoped memory for tpu_custom_call.1']
    #allocation10 [shape = 'u8[16384]{0}', space=vmem, size = 0x4000, scoped, tag = 'output window, operand 0']
    %12 = vsyncpa [#allocation3], 0
    %s13 = scalar_lea.sflag [#allocation3], 1
    %14 = vsyncpa %s13, 0
    %15 = vsyncpa [#allocation6], 0
    %16 = vsyncpa [#allocation9], 0
    %17 = vsyncpa [#allocation4], 0
    %s18 = scalar_lea.sflag [#allocation4], 1
    %19 = vsyncpa %s18, 0
    loop: start=0, step=1, limit=4
    $region2: #{tpu_custom_call.1} parent=1 // loop_pre_header
      _
    $region3: #{tpu_custom_call.1} parent=1 // loop_header
      %s21 = sphi 0, %s25
      %p22 = scmp.ge.s32.totalorder %s21, 4
      %s31 = sphi 0, %s33
      %s34 = sphi 0, %s31
      %s35 = sphi 0, %s34
      %s51 = sphi 0, %s35
      %s55 = sphi 0, %s55
      %s57 = sphi 0, %s55
      %s58 = sphi 0, %s57
      %s72 = sphi 0, %s58
      %s76 = sphi 0, %s76
      %s78 = sphi 0, %s76
      %s79 = sphi 0, %s78
      %s93 = sphi 0, %s79
      %s97 = sphi 0, %s97
      %s99 = sphi 0, %s97
      %s100 = sphi 0, %s99
      %s114 = sphi 0, %s100
      %s118 = sphi 0, %s118
      %s120 = sphi 0, %s118
      %s121 = sphi 0, %s120
      %s135 = sphi 0, %s121
      %s139 = sphi 0, %s139
      %s141 = sphi 0, %s139
      %s142 = sphi 0, %s141
      %s156 = sphi 0, %s142
      %s160 = sphi 0, %s160
      %s162 = sphi 0, %s160
      %s163 = sphi 0, %s162
      %s177 = sphi 0, %s163
      %s183 = sphi 0, %s185
      %s186 = sphi 0, %s183
      %s187 = sphi 0, %s186
      %s203 = sphi 0, %s187
    $region4: #{tpu_custom_call.1} parent=1 // loop_header_branch
      %24 = sbr.rel (%p22) target = $region8
    $region5: #{tpu_custom_call.1} parent=1 // loop_body
      %s26 = ssub.s32 %s21, 1
      %s27 = ssub.s32 %s21, 2
      %s28 = sadd.s32 %s21, 1
      %s29 = ssub.s32 %s21, %s28
      %p30 = scmp.eq.s32.totalorder %s29, 0
      %s32 = sadd.s32 %s31, 1
      %s33 = scalar_select %p30, %s31, %s32
      %p36 = pneg %p30
      %p37 = scmp.eq.s32.totalorder %s21, 1
      %p38 = por %p36, %p37
      %p39 = scmp.ne.s32.totalorder %s31, %s34
      %p40 = scmp.eq.s32.totalorder %s21, 0
      %p41 = por %p39, %p40
      %p42 = scmp.ne.s32.totalorder %s31, %s34
      %p43 = scmp.eq.s32.totalorder %s26, 1
      %p44 = por %p42, %p43
      %p45 = scmp.ne.s32.totalorder %s34, %s35
      %p46 = scmp.eq.s32.totalorder %s26, 0
      %p47 = por %p45, %p46
      %p48 = scmp.ne.s32.totalorder %s34, %s35
      %p49 = scmp.eq.s32.totalorder %s27, 1
      %p50 = por %p48, %p49
      %p52 = scmp.ne.s32.totalorder %s35, %s51
      %p53 = scmp.eq.s32.totalorder %s27, 0
      %p54 = por %p52, %p53
      %s56 = sadd.s32 %s55, 1
      %p59 = scmp.eq.s32.totalorder %s21, 1
      %p60 = scmp.ne.s32.totalorder %s55, %s57
      %p61 = scmp.eq.s32.totalorder %s21, 0
      %p62 = por %p60, %p61
      %p63 = scmp.ne.s32.totalorder %s55, %s57
      %p64 = scmp.eq.s32.totalorder %s26, 1
      %p65 = por %p63, %p64
      %p66 = scmp.ne.s32.totalorder %s57, %s58
      %p67 = scmp.eq.s32.totalorder %s26, 0
      %p68 = por %p66, %p67
      %p69 = scmp.ne.s32.totalorder %s57, %s58
      %p70 = scmp.eq.s32.totalorder %s27, 1
      %p71 = por %p69, %p70
      %p73 = scmp.ne.s32.totalorder %s58, %s72
      %p74 = scmp.eq.s32.totalorder %s27, 0
      %p75 = por %p73, %p74
      %s77 = sadd.s32 %s76, 1
      %p80 = scmp.eq.s32.totalorder %s21, 1
      %p81 = scmp.ne.s32.totalorder %s76, %s78
      %p82 = scmp.eq.s32.totalorder %s21, 0
      %p83 = por %p81, %p82
      %p84 = scmp.ne.s32.totalorder %s76, %s78
      %p85 = scmp.eq.s32.totalorder %s26, 1
      %p86 = por %p84, %p85
      %p87 = scmp.ne.s32.totalorder %s78, %s79
      %p88 = scmp.eq.s32.totalorder %s26, 0
      %p89 = por %p87, %p88
      %p90 = scmp.ne.s32.totalorder %s78, %s79
      %p91 = scmp.eq.s32.totalorder %s27, 1
      %p92 = por %p90, %p91
      %p94 = scmp.ne.s32.totalorder %s79, %s93
      %p95 = scmp.eq.s32.totalorder %s27, 0
      %p96 = por %p94, %p95
      %s98 = sadd.s32 %s97, 1
      %p101 = scmp.eq.s32.totalorder %s21, 1
      %p102 = scmp.ne.s32.totalorder %s97, %s99
      %p103 = scmp.eq.s32.totalorder %s21, 0
      %p104 = por %p102, %p103
      %p105 = scmp.ne.s32.totalorder %s97, %s99
      %p106 = scmp.eq.s32.totalorder %s26, 1
      %p107 = por %p105, %p106
      %p108 = scmp.ne.s32.totalorder %s99, %s100
      %p109 = scmp.eq.s32.totalorder %s26, 0
      %p110 = por %p108, %p109
      %p111 = scmp.ne.s32.totalorder %s99, %s100
      %p112 = scmp.eq.s32.totalorder %s27, 1
      %p113 = por %p111, %p112
      %p115 = scmp.ne.s32.totalorder %s100, %s114
      %p116 = scmp.eq.s32.totalorder %s27, 0
      %p117 = por %p115, %p116
      %s119 = sadd.s32 %s118, 1
      %p122 = scmp.eq.s32.totalorder %s21, 1
      %p123 = scmp.ne.s32.totalorder %s118, %s120
      %p124 = scmp.eq.s32.totalorder %s21, 0
      %p125 = por %p123, %p124
      %p126 = scmp.ne.s32.totalorder %s118, %s120
      %p127 = scmp.eq.s32.totalorder %s26, 1
      %p128 = por %p126, %p127
      %p129 = scmp.ne.s32.totalorder %s120, %s121
      %p130 = scmp.eq.s32.totalorder %s26, 0
      %p131 = por %p129, %p130
      %p132 = scmp.ne.s32.totalorder %s120, %s121
      %p133 = scmp.eq.s32.totalorder %s27, 1
      %p134 = por %p132, %p133
      %p136 = scmp.ne.s32.totalorder %s121, %s135
      %p137 = scmp.eq.s32.totalorder %s27, 0
      %p138 = por %p136, %p137
      %s140 = sadd.s32 %s139, 1
      %p143 = scmp.eq.s32.totalorder %s21, 1
      %p144 = scmp.ne.s32.totalorder %s139, %s141
      %p145 = scmp.eq.s32.totalorder %s21, 0
      %p146 = por %p144, %p145
      %p147 = scmp.ne.s32.totalorder %s139, %s141
      %p148 = scmp.eq.s32.totalorder %s26, 1
      %p149 = por %p147, %p148
      %p150 = scmp.ne.s32.totalorder %s141, %s142
      %p151 = scmp.eq.s32.totalorder %s26, 0
      %p152 = por %p150, %p151
      %p153 = scmp.ne.s32.totalorder %s141, %s142
      %p154 = scmp.eq.s32.totalorder %s27, 1
      %p155 = por %p153, %p154
      %p157 = scmp.ne.s32.totalorder %s142, %s156
      %p158 = scmp.eq.s32.totalorder %s27, 0
      %p159 = por %p157, %p158
      %s161 = sadd.s32 %s160, 1
      %p164 = scmp.eq.s32.totalorder %s21, 1
      %p165 = scmp.ne.s32.totalorder %s160, %s162
      %p166 = scmp.eq.s32.totalorder %s21, 0
      %p167 = por %p165, %p166
      %p168 = scmp.ne.s32.totalorder %s160, %s162
      %p169 = scmp.eq.s32.totalorder %s26, 1
      %p170 = por %p168, %p169
      %p171 = scmp.ne.s32.totalorder %s162, %s163
      %p172 = scmp.eq.s32.totalorder %s26, 0
      %p173 = por %p171, %p172
      %p174 = scmp.ne.s32.totalorder %s162, %s163
      %p175 = scmp.eq.s32.totalorder %s27, 1
      %p176 = por %p174, %p175
      %p178 = scmp.ne.s32.totalorder %s163, %s177
      %p179 = scmp.eq.s32.totalorder %s27, 0
      %p180 = por %p178, %p179
      %s181 = ssub.s32 %s21, %s28
      %p182 = scmp.eq.s32.totalorder %s181, 0
      %s184 = sadd.s32 %s183, 1
      %s185 = scalar_select %p182, %s183, %s184
      %p188 = pneg %p182
      %p189 = scmp.eq.s32.totalorder %s21, 1
      %p190 = por %p188, %p189
      %p191 = scmp.ne.s32.totalorder %s183, %s186
      %p192 = scmp.eq.s32.totalorder %s21, 0
      %p193 = por %p191, %p192
      %p194 = scmp.ne.s32.totalorder %s183, %s186
      %p195 = scmp.eq.s32.totalorder %s26, 1
      %p196 = por %p194, %p195
      %p197 = scmp.ne.s32.totalorder %s186, %s187
      %p198 = scmp.eq.s32.totalorder %s26, 0
      %p199 = por %p197, %p198
      %p200 = scmp.ne.s32.totalorder %s186, %s187
      %p201 = scmp.eq.s32.totalorder %s27, 1
      %p202 = por %p200, %p201
      %p204 = scmp.ne.s32.totalorder %s187, %s203
      %p205 = scmp.eq.s32.totalorder %s27, 0
      %p206 = por %p204, %p205
      %p207 = scmp.le.s32.totalorder 1, %s21
      %p208 = scmp.lt.s32.totalorder %s21, 3
      %p209 = pnand %p207, %p208
      %p210 = pneg %p209
      // Predicated region
      $region9: #{tpu_custom_call.1} parent=5 // pred_check
        _
      $region10: #{tpu_custom_call.1} parent=5 // pred_check_branch
        %212 = sbr.rel (%p209) target = $region12
      $region11: #{tpu_custom_call.1} parent=5 // pred_region
        %s213 = ssub.s32 %s21, 1
        // Predicated region
        $region13: #{tpu_custom_call.1} parent=11 // pred_check
          %p214 = pneg %p68
        $region14: #{tpu_custom_call.1} parent=11 // pred_check_branch
          %216 = sbr.rel (%p214) target = $region16
        $region15: #{tpu_custom_call.1} parent=11 // pred_region
          %s218 = ssub.s32 4096, 4096
          %219 = vsyncadd [#allocation6], %s218
          %s220 = sshll.u32 [#allocation5], 4
          %s221 = int_to_ptr.vmem [resolvable:$true] %s220
          %226 = dma.hbm_to_vmem [thread:$0]  %s1, 4096, %s221, [#allocation6], 256, 256, 16
        $region16: #{tpu_custom_call.1} parent=11 // pred_fallthru
          _
        // Predicated region
        $region17: #{tpu_custom_call.1} parent=11 // pred_check
          %p227 = pneg %p89
        $region18: #{tpu_custom_call.1} parent=11 // pred_check_branch
          %229 = sbr.rel (%p227) target = $region20
        $region19: #{tpu_custom_call.1} parent=11 // pred_region
          _
        $region20: #{tpu_custom_call.1} parent=11 // pred_fallthru
          _
        // Predicated region
        $region21: #{tpu_custom_call.1} parent=11 // pred_check
          %p230 = pneg %p110
        $region22: #{tpu_custom_call.1} parent=11 // pred_check_branch
          %232 = sbr.rel (%p230) target = $region24
        $region23: #{tpu_custom_call.1} parent=11 // pred_region
          %s234 = ssub.s32 12288, 12288
          %235 = vsyncadd [#allocation6], %s234
          %s236 = sshll.u32 [#allocation7], 4
          %s237 = int_to_ptr.vmem [resolvable:$true] %s236
          %242 = dma.hbm_to_vmem [thread:$0]  %s3, 12288, %s237, [#allocation6], 192, 192, 12
        $region24: #{tpu_custom_call.1} parent=11 // pred_fallthru
          _
        // Predicated region
        $region25: #{tpu_custom_call.1} parent=11 // pred_check
          %p243 = pneg %p131
        $region26: #{tpu_custom_call.1} parent=11 // pred_check_branch
          %245 = sbr.rel (%p243) target = $region28
        $region27: #{tpu_custom_call.1} parent=11 // pred_region
          _
        $region28: #{tpu_custom_call.1} parent=11 // pred_fallthru
          _
        // Predicated region
        $region29: #{tpu_custom_call.1} parent=11 // pred_check
          %p246 = pneg %p152
        $region30: #{tpu_custom_call.1} parent=11 // pred_check_branch
          %248 = sbr.rel (%p246) target = $region32
        $region31: #{tpu_custom_call.1} parent=11 // pred_region
          %s250 = ssub.s32 3072, 3072
          %251 = vsyncadd [#allocation9], %s250
          %s252 = sshll.u32 [#allocation8], 4
          %s253 = int_to_ptr.vmem [resolvable:$true] %s252
          %258 = dma.hbm_to_vmem [thread:$0]  %s5, 3072, %s253, [#allocation9], 64, 64, 4
        $region32: #{tpu_custom_call.1} parent=11 // pred_fallthru
          _
        // Predicated region
        $region33: #{tpu_custom_call.1} parent=11 // pred_check
          %p259 = pneg %p173
        $region34: #{tpu_custom_call.1} parent=11 // pred_check_branch
          %261 = sbr.rel (%p259) target = $region36
        $region35: #{tpu_custom_call.1} parent=11 // pred_region
          _
        $region36: #{tpu_custom_call.1} parent=11 // pred_fallthru
          _
      $region12: #{tpu_custom_call.1} parent=5 // pred_fallthru
        _
      %p262 = scmp.lt.s32.totalorder %s21, 2
      // Predicated region
      $region37: #{tpu_custom_call.1} parent=5 // pred_check
        %p263 = pneg %p262
      $region38: #{tpu_custom_call.1} parent=5 // pred_check_branch
        %265 = sbr.rel (%p263) target = $region40
      $region39: #{tpu_custom_call.1} parent=5 // pred_region
        // Predicated region
        $region41: #{tpu_custom_call.1} parent=39 // pred_check
          %p266 = pneg %p41
        $region42: #{tpu_custom_call.1} parent=39 // pred_check_branch
          %268 = sbr.rel (%p266) target = $region44
        $region43: #{tpu_custom_call.1} parent=39 // pred_region
          %s269 = sand.u32 %s31, 1
          %s270 = scalar_lea.sflag [#allocation3], %s269
          %s271 = sand.u32 %s31, 1
          %s272 = smul.addr %s271, 8
          %s273 = scalar_lea.vmem [#allocation2], %s272
          %s274 = smul.u32 2, %s21
          %s276 = ssub.s32 128, 128
          %277 = vsyncadd %s270, %s276
          %s278 = smul.addr %s274, 64
          %s279 = scalar_lea.hbm %s0, %s278
          %s280 = sshll.u32 %s273, 4
          %s281 = int_to_ptr.vmem [resolvable:$true] %s280
          %286 = dma.hbm_to_vmem [thread:$0]  %s279, 128, %s281, %s270, 64, 64, 4
        $region44: #{tpu_custom_call.1} parent=39 // pred_fallthru
          _
      $region40: #{tpu_custom_call.1} parent=5 // pred_fallthru
        _
      %p287 = scmp.le.s32.totalorder 1, %s21
      %p288 = scmp.lt.s32.totalorder %s21, 3
      %p289 = pnand %p287, %p288
      %p290 = pneg %p289
      // Predicated region
      $region45: #{tpu_custom_call.1} parent=5 // pred_check
        _
      $region46: #{tpu_custom_call.1} parent=5 // pred_check_branch
        %292 = sbr.rel (%p289) target = $region48
      $region47: #{tpu_custom_call.1} parent=5 // pred_region
        %s293 = ssub.s32 %s21, 1
        %s294 = sand.u32 %s34, 1
        %s295 = scalar_lea.sflag [#allocation3], %s294
        %s296 = sand.u32 %s34, 1
        %s297 = smul.addr %s296, 8
        %s298 = scalar_lea.vmem [#allocation2], %s297
        // Predicated region
        $region49: #{tpu_custom_call.1} parent=47 // pred_check
          %p299 = pneg %p47
        $region50: #{tpu_custom_call.1} parent=47 // pred_check_branch
          %301 = sbr.rel (%p299) target = $region52
        $region51: #{tpu_custom_call.1} parent=47 // pred_region
          %302 = dma.done %s295, 128
        $region52: #{tpu_custom_call.1} parent=47 // pred_fallthru
          _
        // Predicated region
        $region53: #{tpu_custom_call.1} parent=47 // pred_check
          %p303 = pneg %p68
        $region54: #{tpu_custom_call.1} parent=47 // pred_check_branch
          %305 = sbr.rel (%p303) target = $region56
        $region55: #{tpu_custom_call.1} parent=47 // pred_region
          %306 = dma.done [#allocation6], 4096
        $region56: #{tpu_custom_call.1} parent=47 // pred_fallthru
          _
        // Predicated region
        $region57: #{tpu_custom_call.1} parent=47 // pred_check
          %p307 = pneg %p110
        $region58: #{tpu_custom_call.1} parent=47 // pred_check_branch
          %309 = sbr.rel (%p307) target = $region60
        $region59: #{tpu_custom_call.1} parent=47 // pred_region
          %310 = dma.done [#allocation6], 12288
        $region60: #{tpu_custom_call.1} parent=47 // pred_fallthru
          _
        // Predicated region
        $region61: #{tpu_custom_call.1} parent=47 // pred_check
          %p311 = pneg %p152
        $region62: #{tpu_custom_call.1} parent=47 // pred_check_branch
          %313 = sbr.rel (%p311) target = $region64
        $region63: #{tpu_custom_call.1} parent=47 // pred_region
          %314 = dma.done [#allocation9], 3072
        $region64: #{tpu_custom_call.1} parent=47 // pred_fallthru
          _
        %s315 = sand.u32 %s34, 1
        %s316 = scalar_lea.sflag [#allocation3], %s315
        %s317 = sand.u32 %s34, 1
        %s318 = smul.addr %s317, 8
        %s319 = scalar_lea.vmem [#allocation2], %s318
        %p320 = pneg %p47
        %p321 = pneg %p44
        %p322 = pneg %p68
        %p323 = pneg %p65
        %p324 = pneg %p89
        %p325 = pneg %p86
        %p326 = pneg %p110
        %p327 = pneg %p107
        %p328 = pneg %p131
        %p329 = pneg %p128
        %p330 = pneg %p152
        %p331 = pneg %p149
        %p332 = pneg %p173
        %p333 = pneg %p170
        %p334 = pneg %p199
        %p335 = pneg %p196
        %s336 = sand.u32 %s186, 1
        %s337 = scalar_lea.sflag [#allocation4], %s336
        %s338 = sand.u32 %s186, 1
        %s339 = smul.addr %s338, 16
        %s340 = scalar_lea.vmem [#allocation10], %s339
        %s341 = smul.u32 2, %s26
        %s342 = smul.u32 2, %s26
        %v344 = vld [vmem:[%s298] sm:$0xf]
        %v345 = vld [vmem:[%s298 + $0x4] sm:$0xf]
        %v346 = vld [vmem:[#allocation5] sm:$0xff]
        %v347 = vld [vmem:[#allocation5 + $0x8] sm:$0xff]
        %v348 = vld [vmem:[#allocation5 + $0x10] sm:$0xff]
        %v349 = vld [vmem:[#allocation5 + $0x18] sm:$0xff]
        %v350 = vld [vmem:[#allocation5 + $0x20] sm:$0xff]
        %v351 = vld [vmem:[#allocation5 + $0x28] sm:$0xff]
        %v352 = vld [vmem:[#allocation5 + $0x30] sm:$0xff]
        %v353 = vld [vmem:[#allocation5 + $0x38] sm:$0xff]
        %v354 = vld [vmem:[#allocation5 + $0x40] sm:$0xff]
        %v355 = vld [vmem:[#allocation5 + $0x48] sm:$0xff]
        %v356 = vld [vmem:[#allocation5 + $0x50] sm:$0xff]
        %v357 = vld [vmem:[#allocation5 + $0x58] sm:$0xff]
        %v358 = vld [vmem:[#allocation5 + $0x60] sm:$0xff]
        %v359 = vld [vmem:[#allocation5 + $0x68] sm:$0xff]
        %v360 = vld [vmem:[#allocation5 + $0x70] sm:$0xff]
        %v361 = vld [vmem:[#allocation5 + $0x78] sm:$0xff]
        %v362 = vld [vmem:[#allocation5 + $0x80] sm:$0xff]
        %v363 = vld [vmem:[#allocation5 + $0x88] sm:$0xff]
        %v364 = vld [vmem:[#allocation5 + $0x90] sm:$0xff]
        %v365 = vld [vmem:[#allocation5 + $0x98] sm:$0xff]
        %v366 = vld [vmem:[#allocation5 + $0xa0] sm:$0xff]
        %v367 = vld [vmem:[#allocation5 + $0xa8] sm:$0xff]
        %v368 = vld [vmem:[#allocation5 + $0xb0] sm:$0xff]
        %v369 = vld [vmem:[#allocation5 + $0xb8] sm:$0xff]
        %v370 = vld [vmem:[#allocation5 + $0xc0] sm:$0xff]
        %v371 = vld [vmem:[#allocation5 + $0xc8] sm:$0xff]
        %v372 = vld [vmem:[#allocation5 + $0xd0] sm:$0xff]
        %v373 = vld [vmem:[#allocation5 + $0xd8] sm:$0xff]
        %v374 = vld [vmem:[#allocation5 + $0xe0] sm:$0xff]
        %v375 = vld [vmem:[#allocation5 + $0xe8] sm:$0xff]
        %v376 = vld [vmem:[#allocation5 + $0xf0] sm:$0xff]
        %v377 = vld [vmem:[#allocation5 + $0xf8] sm:$0xff]
        %v380 = vunpack.c.l.b16 %v344
        %v381 = vunpack.c.l.b16 %v345
        %v382 = vpack.c.b16 %v381, %v380
        %v416 = vunpack.c.l.b16 %v346
        %v417 = vunpack.c.h.b16 %v346
        %v418 = vunpack.c.l.b16 %v347
        %v419 = vunpack.c.h.b16 %v347
        %v420 = vunpack.c.l.b16 %v348
        %v421 = vunpack.c.h.b16 %v348
        %v422 = vunpack.c.l.b16 %v349
        %v423 = vunpack.c.h.b16 %v349
        %v424 = vunpack.c.l.b16 %v350
        %v425 = vunpack.c.h.b16 %v350
        %v426 = vunpack.c.l.b16 %v351
        %v427 = vunpack.c.h.b16 %v351
        %v428 = vunpack.c.l.b16 %v352
        %v429 = vunpack.c.h.b16 %v352
        %v430 = vunpack.c.l.b16 %v353
        %v431 = vunpack.c.h.b16 %v353
        %v432 = vunpack.c.l.b16 %v354
        %v433 = vunpack.c.h.b16 %v354
        %v434 = vunpack.c.l.b16 %v355
        %v435 = vunpack.c.h.b16 %v355
        %v436 = vunpack.c.l.b16 %v356
        %v437 = vunpack.c.h.b16 %v356
        %v438 = vunpack.c.l.b16 %v357
        %v439 = vunpack.c.h.b16 %v357
        %v440 = vunpack.c.l.b16 %v358
        %v441 = vunpack.c.h.b16 %v358
        %v442 = vunpack.c.l.b16 %v359
        %v443 = vunpack.c.h.b16 %v359
        %v444 = vunpack.c.l.b16 %v360
        %v445 = vunpack.c.h.b16 %v360
        %v446 = vunpack.c.l.b16 %v361
        %v447 = vunpack.c.h.b16 %v361
        %v448 = vunpack.c.l.b16 %v362
        %v449 = vunpack.c.h.b16 %v362
        %v450 = vunpack.c.l.b16 %v363
        %v451 = vunpack.c.h.b16 %v363
        %v452 = vunpack.c.l.b16 %v364
        %v453 = vunpack.c.h.b16 %v364
        %v454 = vunpack.c.l.b16 %v365
        %v455 = vunpack.c.h.b16 %v365
        %v456 = vunpack.c.l.b16 %v366
        %v457 = vunpack.c.h.b16 %v366
        %v458 = vunpack.c.l.b16 %v367
        %v459 = vunpack.c.h.b16 %v367
        %v460 = vunpack.c.l.b16 %v368
        %v461 = vunpack.c.h.b16 %v368
        %v462 = vunpack.c.l.b16 %v369
        %v463 = vunpack.c.h.b16 %v369
        %v464 = vunpack.c.l.b16 %v370
        %v465 = vunpack.c.h.b16 %v370
        %v466 = vunpack.c.l.b16 %v371
        %v467 = vunpack.c.h.b16 %v371
        %v468 = vunpack.c.l.b16 %v372
        %v469 = vunpack.c.h.b16 %v372
        %v470 = vunpack.c.l.b16 %v373
        %v471 = vunpack.c.h.b16 %v373
        %v472 = vunpack.c.l.b16 %v374
        %v473 = vunpack.c.h.b16 %v374
        %v474 = vunpack.c.l.b16 %v375
        %v475 = vunpack.c.h.b16 %v375
        %v476 = vunpack.c.l.b16 %v376
        %v477 = vunpack.c.h.b16 %v376
        %v478 = vunpack.c.l.b16 %v377
        %v479 = vunpack.c.h.b16 %v377
        %v480 = vpack.c.b16 %v420, %v416
        %v481 = vpack.c.b16 %v421, %v417
        %v482 = vpack.c.b16 %v422, %v418
        %v483 = vpack.c.b16 %v423, %v419
        %v484 = vpack.c.b16 %v428, %v424
        %v485 = vpack.c.b16 %v429, %v425
        %v486 = vpack.c.b16 %v430, %v426
        %v487 = vpack.c.b16 %v431, %v427
        %v488 = vpack.c.b16 %v436, %v432
        %v489 = vpack.c.b16 %v437, %v433
        %v490 = vpack.c.b16 %v438, %v434
        %v491 = vpack.c.b16 %v439, %v435
        %v492 = vpack.c.b16 %v444, %v440
        %v493 = vpack.c.b16 %v445, %v441
        %v494 = vpack.c.b16 %v446, %v442
        %v495 = vpack.c.b16 %v447, %v443
        %v496 = vpack.c.b16 %v452, %v448
        %v497 = vpack.c.b16 %v453, %v449
        %v498 = vpack.c.b16 %v454, %v450
        %v499 = vpack.c.b16 %v455, %v451
        %v500 = vpack.c.b16 %v460, %v456
        %v501 = vpack.c.b16 %v461, %v457
        %v502 = vpack.c.b16 %v462, %v458
        %v503 = vpack.c.b16 %v463, %v459
        %v504 = vpack.c.b16 %v468, %v464
        %v505 = vpack.c.b16 %v469, %v465
        %v506 = vpack.c.b16 %v470, %v466
        %v507 = vpack.c.b16 %v471, %v467
        %v508 = vpack.c.b16 %v476, %v472
        %v509 = vpack.c.b16 %v477, %v473
        %v510 = vpack.c.b16 %v478, %v474
        %v511 = vpack.c.b16 %v479, %v475
        %544 = vmatprep.subr.bf16.mxu0 %v481
        %545 = vmatpush1.bf16.msra.mxu0 %v480
        %546 = vmatprep.subr.bf16.mxu0 %v485
        %547 = vmatpush1.bf16.msra.mxu0 %v484
        %548 = vmatprep.subr.bf16.mxu0 %v489
        %549 = vmatpush1.bf16.msra.mxu0 %v488
        %550 = vmatprep.subr.bf16.mxu0 %v493
        %551 = vmatpush1.bf16.msra.mxu0 %v492
        %552 = vmatprep.subr.bf16.mxu0 %v497
        %553 = vmatpush1.bf16.msra.mxu0 %v496
        %554 = vmatprep.subr.bf16.mxu0 %v501
        %555 = vmatpush1.bf16.msra.mxu0 %v500
        %556 = vmatprep.subr.bf16.mxu0 %v505
        %557 = vmatpush1.bf16.msra.mxu0 %v504
        %558 = vmatprep.subr.bf16.mxu0 %v509
        %559 = vmatpush1.bf16.msra.mxu0 %v508
        %560 = vmatprep.subr.bf16.mxu0 0
        %561 = vmatpush1.bf16.msra.mxu0 0
        %562 = vmatprep.subr.bf16.mxu0 0
        %563 = vmatpush1.bf16.msra.mxu0 0
        %564 = vmatprep.subr.bf16.mxu0 0
        %565 = vmatpush1.bf16.msra.mxu0 0
        %566 = vmatprep.subr.bf16.mxu0 0
        %567 = vmatpush1.bf16.msra.mxu0 0
        %568 = vmatprep.subr.bf16.mxu0 0
        %569 = vmatpush1.bf16.msra.mxu0 0
        %570 = vmatprep.subr.bf16.mxu0 0
        %571 = vmatpush1.bf16.msra.mxu0 0
        %572 = vmatprep.subr.bf16.mxu0 0
        %573 = vmatpush1.bf16.msra.mxu0 0
        %574 = vmatprep.subr.bf16.mxu0 0
        %575 = vmatpush1.bf16.msra.mxu0 0
        %576 = vmatprep.mubr.bf16.mxu0 0
        %577 = vmatmul.mubr.bf16.gmra.mrb[0].mxu0 %v382
        %v578 = vpop.f32.mrb[0].mxu0
        %v579 = vadd.f32 0.0, %v578
        %v580 = vpop.f32.mrb[0].mxu0
        %v581 = vadd.f32 0.0, %v580
        %v582 = vpop.f32.mrb[0].mxu0
        %v583 = vadd.f32 0.0, %v582
        %v584 = vpop.f32.mrb[0].mxu0
        %v585 = vadd.f32 0.0, %v584
        %586 = vdwg.mxu0
        %587 = vmatprep.subr.bf16.mxu0 %v483
        %588 = vmatpush1.bf16.msra.mxu0 %v482
        %589 = vmatprep.subr.bf16.mxu0 %v487
        %590 = vmatpush1.bf16.msra.mxu0 %v486
        %591 = vmatprep.subr.bf16.mxu0 %v491
        %592 = vmatpush1.bf16.msra.mxu0 %v490
        %593 = vmatprep.subr.bf16.mxu0 %v495
        %594 = vmatpush1.bf16.msra.mxu0 %v494
        %595 = vmatprep.subr.bf16.mxu0 %v499
        %596 = vmatpush1.bf16.msra.mxu0 %v498
        %597 = vmatprep.subr.bf16.mxu0 %v503
        %598 = vmatpush1.bf16.msra.mxu0 %v502
        %599 = vmatprep.subr.bf16.mxu0 %v507
        %600 = vmatpush1.bf16.msra.mxu0 %v506
        %601 = vmatprep.subr.bf16.mxu0 %v511
        %602 = vmatpush1.bf16.msra.mxu0 %v510
        %603 = vmatprep.subr.bf16.mxu0 0
        %604 = vmatpush1.bf16.msra.mxu0 0
        %605 = vmatprep.subr.bf16.mxu0 0
        %606 = vmatpush1.bf16.msra.mxu0 0
        %607 = vmatprep.subr.bf16.mxu0 0
        %608 = vmatpush1.bf16.msra.mxu0 0
        %609 = vmatprep.subr.bf16.mxu0 0
        %610 = vmatpush1.bf16.msra.mxu0 0
        %611 = vmatprep.subr.bf16.mxu0 0
        %612 = vmatpush1.bf16.msra.mxu0 0
        %613 = vmatprep.subr.bf16.mxu0 0
        %614 = vmatpush1.bf16.msra.mxu0 0
        %615 = vmatprep.subr.bf16.mxu0 0
        %616 = vmatpush1.bf16.msra.mxu0 0
        %617 = vmatprep.subr.bf16.mxu0 0
        %618 = vmatpush1.bf16.msra.mxu0 0
        %619 = vmatprep.mubr.bf16.mxu0 0
        %620 = vmatmul.mubr.bf16.gmra.mrb[0].mxu0 %v382
        %v621 = vpop.f32.mrb[0].mxu0
        %v622 = vadd.f32 0.0, %v621
        %v623 = vpop.f32.mrb[0].mxu0
        %v624 = vadd.f32 0.0, %v623
        %v625 = vpop.f32.mrb[0].mxu0
        %v626 = vadd.f32 0.0, %v625
        %v627 = vpop.f32.mrb[0].mxu0
        %v628 = vadd.f32 0.0, %v627
        %629 = vdwg.mxu0
        %v630 = vpack.c.bf16 %v583, %v579
        %v631 = vpack.c.bf16 %v585, %v581
        %v632 = vpack.c.bf16 %v626, %v622
        %v633 = vpack.c.bf16 %v628, %v624
        %v634 = vld [vmem:[%s2] sm:$0xf]
        %v637 = vunpack.c.l.s4 1966171168
        %v638 = vunpack.c.0.s8 %v637
        %v639 = vlaneseq
        %v640 = vshrl.u32 %v639, 7
        %v641 = vsub.s32 %v638, %v640
        %v642 = vrot.slane %v634, %v641
        %v643 = vcombine.high %v642, %v642
        %v645 = vunpack.c.l.s4 1966171168
        %v646 = vunpack.c.0.s8 %v645
        %v647 = vlaneseq
        %v648 = vshrl.u32 %v647, 7
        %v649 = vsub.s32 %v646, %v648
        %v650 = vrot.slane %v642, %v649
        %v652 = vunpack.c.l.s4 1966171168
        %v653 = vunpack.c.0.s8 %v652
        %v654 = vlaneseq
        %v655 = vshrl.u32 %v654, 7
        %v656 = vsub.s32 %v653, %v655
        %v657 = vrot.slane %v643, %v656
        %v658 = vcombine.high %v650, %v650
        %v659 = vcombine.high %v657, %v657
        %v661 = vpack.i.b16 %v650, %v650
        %v663 = vlaneseq
        %v664 = vshrl.u32 %v663, 7
        %v665 = vsub.s32 0, %v664
        %v666 = vrot.slane %v661, %v665
        %v668 = vpack.i.b16 %v657, %v657
        %v670 = vlaneseq
        %v671 = vshrl.u32 %v670, 7
        %v672 = vsub.s32 0, %v671
        %v673 = vrot.slane %v668, %v672
        %v675 = vpack.i.b16 %v658, %v658
        %v677 = vlaneseq
        %v678 = vshrl.u32 %v677, 7
        %v679 = vsub.s32 0, %v678
        %v680 = vrot.slane %v675, %v679
        %v682 = vpack.i.b16 %v659, %v659
        %v684 = vlaneseq
        %v685 = vshrl.u32 %v684, 7
        %v686 = vsub.s32 0, %v685
        %v687 = vrot.slane %v682, %v686
        %v688 = vadd.bf16 %v630, %v666
        %v689 = vadd.bf16 %v631, %v673
        %v690 = vadd.bf16 %v632, %v680
        %v691 = vadd.bf16 %v633, %v687
        %v692 = vmax.bf16 %v688, 0
        %v693 = vmax.bf16 %v689, 0
        %v694 = vmax.bf16 %v690, 0
        %v695 = vmax.bf16 %v691, 0
        %v696 = vld [vmem:[#allocation7] sm:$0xff]
        %v697 = vld [vmem:[#allocation7 + $0x8] sm:$0xf]
        %v698 = vld [vmem:[#allocation7 + $0xc] sm:$0xff]
        %v699 = vld [vmem:[#allocation7 + $0x14] sm:$0xf]
        %v700 = vld [vmem:[#allocation7 + $0x18] sm:$0xff]
        %v701 = vld [vmem:[#allocation7 + $0x20] sm:$0xf]
        %v702 = vld [vmem:[#allocation7 + $0x24] sm:$0xff]
        %v703 = vld [vmem:[#allocation7 + $0x2c] sm:$0xf]
        %v704 = vld [vmem:[#allocation7 + $0x30] sm:$0xff]
        %v705 = vld [vmem:[#allocation7 + $0x38] sm:$0xf]
        %v706 = vld [vmem:[#allocation7 + $0x3c] sm:$0xff]
        %v707 = vld [vmem:[#allocation7 + $0x44] sm:$0xf]
        %v708 = vld [vmem:[#allocation7 + $0x48] sm:$0xff]
        %v709 = vld [vmem:[#allocation7 + $0x50] sm:$0xf]
        %v710 = vld [vmem:[#allocation7 + $0x54] sm:$0xff]
        %v711 = vld [vmem:[#allocation7 + $0x5c] sm:$0xf]
        %v712 = vld [vmem:[#allocation7 + $0x60] sm:$0xff]
        %v713 = vld [vmem:[#allocation7 + $0x68] sm:$0xf]
        %v714 = vld [vmem:[#allocation7 + $0x6c] sm:$0xff]
        %v715 = vld [vmem:[#allocation7 + $0x74] sm:$0xf]
        %v716 = vld [vmem:[#allocation7 + $0x78] sm:$0xff]
        %v717 = vld [vmem:[#allocation7 + $0x80] sm:$0xf]
        %v718 = vld [vmem:[#allocation7 + $0x84] sm:$0xff]
        %v719 = vld [vmem:[#allocation7 + $0x8c] sm:$0xf]
        %v720 = vld [vmem:[#allocation7 + $0x90] sm:$0xff]
        %v721 = vld [vmem:[#allocation7 + $0x98] sm:$0xf]
        %v722 = vld [vmem:[#allocation7 + $0x9c] sm:$0xff]
        %v723 = vld [vmem:[#allocation7 + $0xa4] sm:$0xf]
        %v724 = vld [vmem:[#allocation7 + $0xa8] sm:$0xff]
        %v725 = vld [vmem:[#allocation7 + $0xb0] sm:$0xf]
        %v726 = vld [vmem:[#allocation7 + $0xb4] sm:$0xff]
        %v727 = vld [vmem:[#allocation7 + $0xbc] sm:$0xf]
        %v728 = vld [vmem:[#allocation7 + $0xc0] sm:$0xff]
        %v729 = vld [vmem:[#allocation7 + $0xc8] sm:$0xf]
        %v730 = vld [vmem:[#allocation7 + $0xcc] sm:$0xff]
        %v731 = vld [vmem:[#allocation7 + $0xd4] sm:$0xf]
        %v732 = vld [vmem:[#allocation7 + $0xd8] sm:$0xff]
        %v733 = vld [vmem:[#allocation7 + $0xe0] sm:$0xf]
        %v734 = vld [vmem:[#allocation7 + $0xe4] sm:$0xff]
        %v735 = vld [vmem:[#allocation7 + $0xec] sm:$0xf]
        %v736 = vld [vmem:[#allocation7 + $0xf0] sm:$0xff]
        %v737 = vld [vmem:[#allocation7 + $0xf8] sm:$0xf]
        %v738 = vld [vmem:[#allocation7 + $0xfc] sm:$0xff]
        %v739 = vld [vmem:[#allocation7 + $0x104] sm:$0xf]
        %v740 = vld [vmem:[#allocation7 + $0x108] sm:$0xff]
        %v741 = vld [vmem:[#allocation7 + $0x110] sm:$0xf]
        %v742 = vld [vmem:[#allocation7 + $0x114] sm:$0xff]
        %v743 = vld [vmem:[#allocation7 + $0x11c] sm:$0xf]
        %v744 = vld [vmem:[#allocation7 + $0x120] sm:$0xff]
        %v745 = vld [vmem:[#allocation7 + $0x128] sm:$0xf]
        %v746 = vld [vmem:[#allocation7 + $0x12c] sm:$0xff]
        %v747 = vld [vmem:[#allocation7 + $0x134] sm:$0xf]
        %v748 = vld [vmem:[#allocation7 + $0x138] sm:$0xff]
        %v749 = vld [vmem:[#allocation7 + $0x140] sm:$0xf]
        %v750 = vld [vmem:[#allocation7 + $0x144] sm:$0xff]
        %v751 = vld [vmem:[#allocation7 + $0x14c] sm:$0xf]
        %v752 = vld [vmem:[#allocation7 + $0x150] sm:$0xff]
        %v753 = vld [vmem:[#allocation7 + $0x158] sm:$0xf]
        %v754 = vld [vmem:[#allocation7 + $0x15c] sm:$0xff]
        %v755 = vld [vmem:[#allocation7 + $0x164] sm:$0xf]
        %v756 = vld [vmem:[#allocation7 + $0x168] sm:$0xff]
        %v757 = vld [vmem:[#allocation7 + $0x170] sm:$0xf]
        %v758 = vld [vmem:[#allocation7 + $0x174] sm:$0xff]
        %v759 = vld [vmem:[#allocation7 + $0x17c] sm:$0xf]
        %v760 = vld [vmem:[#allocation7 + $0x180] sm:$0xff]
        %v761 = vld [vmem:[#allocation7 + $0x188] sm:$0xf]
        %v762 = vld [vmem:[#allocation7 + $0x18c] sm:$0xff]
        %v763 = vld [vmem:[#allocation7 + $0x194] sm:$0xf]
        %v764 = vld [vmem:[#allocation7 + $0x198] sm:$0xff]
        %v765 = vld [vmem:[#allocation7 + $0x1a0] sm:$0xf]
        %v766 = vld [vmem:[#allocation7 + $0x1a4] sm:$0xff]
        %v767 = vld [vmem:[#allocation7 + $0x1ac] sm:$0xf]
        %v768 = vld [vmem:[#allocation7 + $0x1b0] sm:$0xff]
        %v769 = vld [vmem:[#allocation7 + $0x1b8] sm:$0xf]
        %v770 = vld [vmem:[#allocation7 + $0x1bc] sm:$0xff]
        %v771 = vld [vmem:[#allocation7 + $0x1c4] sm:$0xf]
        %v772 = vld [vmem:[#allocation7 + $0x1c8] sm:$0xff]
        %v773 = vld [vmem:[#allocation7 + $0x1d0] sm:$0xf]
        %v774 = vld [vmem:[#allocation7 + $0x1d4] sm:$0xff]
        %v775 = vld [vmem:[#allocation7 + $0x1dc] sm:$0xf]
        %v776 = vld [vmem:[#allocation7 + $0x1e0] sm:$0xff]
        %v777 = vld [vmem:[#allocation7 + $0x1e8] sm:$0xf]
        %v778 = vld [vmem:[#allocation7 + $0x1ec] sm:$0xff]
        %v779 = vld [vmem:[#allocation7 + $0x1f4] sm:$0xf]
        %v780 = vld [vmem:[#allocation7 + $0x1f8] sm:$0xff]
        %v781 = vld [vmem:[#allocation7 + $0x200] sm:$0xf]
        %v782 = vld [vmem:[#allocation7 + $0x204] sm:$0xff]
        %v783 = vld [vmem:[#allocation7 + $0x20c] sm:$0xf]
        %v784 = vld [vmem:[#allocation7 + $0x210] sm:$0xff]
        %v785 = vld [vmem:[#allocation7 + $0x218] sm:$0xf]
        %v786 = vld [vmem:[#allocation7 + $0x21c] sm:$0xff]
        %v787 = vld [vmem:[#allocation7 + $0x224] sm:$0xf]
        %v788 = vld [vmem:[#allocation7 + $0x228] sm:$0xff]
        %v789 = vld [vmem:[#allocation7 + $0x230] sm:$0xf]
        %v790 = vld [vmem:[#allocation7 + $0x234] sm:$0xff]
        %v791 = vld [vmem:[#allocation7 + $0x23c] sm:$0xf]
        %v792 = vld [vmem:[#allocation7 + $0x240] sm:$0xff]
        %v793 = vld [vmem:[#allocation7 + $0x248] sm:$0xf]
        %v794 = vld [vmem:[#allocation7 + $0x24c] sm:$0xff]
        %v795 = vld [vmem:[#allocation7 + $0x254] sm:$0xf]
        %v796 = vld [vmem:[#allocation7 + $0x258] sm:$0xff]
        %v797 = vld [vmem:[#allocation7 + $0x260] sm:$0xf]
        %v798 = vld [vmem:[#allocation7 + $0x264] sm:$0xff]
        %v799 = vld [vmem:[#allocation7 + $0x26c] sm:$0xf]
        %v800 = vld [vmem:[#allocation7 + $0x270] sm:$0xff]
        %v801 = vld [vmem:[#allocation7 + $0x278] sm:$0xf]
        %v802 = vld [vmem:[#allocation7 + $0x27c] sm:$0xff]
        %v803 = vld [vmem:[#allocation7 + $0x284] sm:$0xf]
        %v804 = vld [vmem:[#allocation7 + $0x288] sm:$0xff]
        %v805 = vld [vmem:[#allocation7 + $0x290] sm:$0xf]
        %v806 = vld [vmem:[#allocation7 + $0x294] sm:$0xff]
        %v807 = vld [vmem:[#allocation7 + $0x29c] sm:$0xf]
        %v808 = vld [vmem:[#allocation7 + $0x2a0] sm:$0xff]
        %v809 = vld [vmem:[#allocation7 + $0x2a8] sm:$0xf]
        %v810 = vld [vmem:[#allocation7 + $0x2ac] sm:$0xff]
        %v811 = vld [vmem:[#allocation7 + $0x2b4] sm:$0xf]
        %v812 = vld [vmem:[#allocation7 + $0x2b8] sm:$0xff]
        %v813 = vld [vmem:[#allocation7 + $0x2c0] sm:$0xf]
        %v814 = vld [vmem:[#allocation7 + $0x2c4] sm:$0xff]
        %v815 = vld [vmem:[#allocation7 + $0x2cc] sm:$0xf]
        %v816 = vld [vmem:[#allocation7 + $0x2d0] sm:$0xff]
        %v817 = vld [vmem:[#allocation7 + $0x2d8] sm:$0xf]
        %v818 = vld [vmem:[#allocation7 + $0x2dc] sm:$0xff]
        %v819 = vld [vmem:[#allocation7 + $0x2e4] sm:$0xf]
        %v820 = vld [vmem:[#allocation7 + $0x2e8] sm:$0xff]
        %v821 = vld [vmem:[#allocation7 + $0x2f0] sm:$0xf]
        %v822 = vld [vmem:[#allocation7 + $0x2f4] sm:$0xff]
        %v823 = vld [vmem:[#allocation7 + $0x2fc] sm:$0xf]
        %v952 = vunpack.c.l.b16 %v696
        %v953 = vunpack.c.h.b16 %v696
        %v954 = vunpack.c.l.b16 %v697
        %v955 = vunpack.c.l.b16 %v698
        %v956 = vunpack.c.h.b16 %v698
        %v957 = vunpack.c.l.b16 %v699
        %v958 = vunpack.c.l.b16 %v700
        %v959 = vunpack.c.h.b16 %v700
        %v960 = vunpack.c.l.b16 %v701
        %v961 = vunpack.c.l.b16 %v702
        %v962 = vunpack.c.h.b16 %v702
        %v963 = vunpack.c.l.b16 %v703
        %v964 = vunpack.c.l.b16 %v704
        %v965 = vunpack.c.h.b16 %v704
        %v966 = vunpack.c.l.b16 %v705
        %v967 = vunpack.c.l.b16 %v706
        %v968 = vunpack.c.h.b16 %v706
        %v969 = vunpack.c.l.b16 %v707
        %v970 = vunpack.c.l.b16 %v708
        %v971 = vunpack.c.h.b16 %v708
        %v972 = vunpack.c.l.b16 %v709
        %v973 = vunpack.c.l.b16 %v710
        %v974 = vunpack.c.h.b16 %v710
        %v975 = vunpack.c.l.b16 %v711
        %v976 = vunpack.c.l.b16 %v712
        %v977 = vunpack.c.h.b16 %v712
        %v978 = vunpack.c.l.b16 %v713
        %v979 = vunpack.c.l.b16 %v714
        %v980 = vunpack.c.h.b16 %v714
        %v981 = vunpack.c.l.b16 %v715
        %v982 = vunpack.c.l.b16 %v716
        %v983 = vunpack.c.h.b16 %v716
        %v984 = vunpack.c.l.b16 %v717
        %v985 = vunpack.c.l.b16 %v718
        %v986 = vunpack.c.h.b16 %v718
        %v987 = vunpack.c.l.b16 %v719
        %v988 = vunpack.c.l.b16 %v720
        %v989 = vunpack.c.h.b16 %v720
        %v990 = vunpack.c.l.b16 %v721
        %v991 = vunpack.c.l.b16 %v722
        %v992 = vunpack.c.h.b16 %v722
        %v993 = vunpack.c.l.b16 %v723
        %v994 = vunpack.c.l.b16 %v724
        %v995 = vunpack.c.h.b16 %v724
        %v996 = vunpack.c.l.b16 %v725
        %v997 = vunpack.c.l.b16 %v726
        %v998 = vunpack.c.h.b16 %v726
        %v999 = vunpack.c.l.b16 %v727
        %v1000 = vunpack.c.l.b16 %v728
        %v1001 = vunpack.c.h.b16 %v728
        %v1002 = vunpack.c.l.b16 %v729
        %v1003 = vunpack.c.l.b16 %v730
        %v1004 = vunpack.c.h.b16 %v730
        %v1005 = vunpack.c.l.b16 %v731
        %v1006 = vunpack.c.l.b16 %v732
        %v1007 = vunpack.c.h.b16 %v732
        %v1008 = vunpack.c.l.b16 %v733
        %v1009 = vunpack.c.l.b16 %v734
        %v1010 = vunpack.c.h.b16 %v734
        %v1011 = vunpack.c.l.b16 %v735
        %v1012 = vunpack.c.l.b16 %v736
        %v1013 = vunpack.c.h.b16 %v736
        %v1014 = vunpack.c.l.b16 %v737
        %v1015 = vunpack.c.l.b16 %v738
        %v1016 = vunpack.c.h.b16 %v738
        %v1017 = vunpack.c.l.b16 %v739
        %v1018 = vunpack.c.l.b16 %v740
        %v1019 = vunpack.c.h.b16 %v740
        %v1020 = vunpack.c.l.b16 %v741
        %v1021 = vunpack.c.l.b16 %v742
        %v1022 = vunpack.c.h.b16 %v742
        %v1023 = vunpack.c.l.b16 %v743
        %v1024 = vunpack.c.l.b16 %v744
        %v1025 = vunpack.c.h.b16 %v744
        %v1026 = vunpack.c.l.b16 %v745
        %v1027 = vunpack.c.l.b16 %v746
        %v1028 = vunpack.c.h.b16 %v746
        %v1029 = vunpack.c.l.b16 %v747
        %v1030 = vunpack.c.l.b16 %v748
        %v1031 = vunpack.c.h.b16 %v748
        %v1032 = vunpack.c.l.b16 %v749
        %v1033 = vunpack.c.l.b16 %v750
        %v1034 = vunpack.c.h.b16 %v750
        %v1035 = vunpack.c.l.b16 %v751
        %v1036 = vunpack.c.l.b16 %v752
        %v1037 = vunpack.c.h.b16 %v752
        %v1038 = vunpack.c.l.b16 %v753
        %v1039 = vunpack.c.l.b16 %v754
        %v1040 = vunpack.c.h.b16 %v754
        %v1041 = vunpack.c.l.b16 %v755
        %v1042 = vunpack.c.l.b16 %v756
        %v1043 = vunpack.c.h.b16 %v756
        %v1044 = vunpack.c.l.b16 %v757
        %v1045 = vunpack.c.l.b16 %v758
        %v1046 = vunpack.c.h.b16 %v758
        %v1047 = vunpack.c.l.b16 %v759
        %v1048 = vunpack.c.l.b16 %v760
        %v1049 = vunpack.c.h.b16 %v760
        %v1050 = vunpack.c.l.b16 %v761
        %v1051 = vunpack.c.l.b16 %v762
        %v1052 = vunpack.c.h.b16 %v762
        %v1053 = vunpack.c.l.b16 %v763
        %v1054 = vunpack.c.l.b16 %v764
        %v1055 = vunpack.c.h.b16 %v764
        %v1056 = vunpack.c.l.b16 %v765
        %v1057 = vunpack.c.l.b16 %v766
        %v1058 = vunpack.c.h.b16 %v766
        %v1059 = vunpack.c.l.b16 %v767
        %v1060 = vunpack.c.l.b16 %v768
        %v1061 = vunpack.c.h.b16 %v768
        %v1062 = vunpack.c.l.b16 %v769
        %v1063 = vunpack.c.l.b16 %v770
        %v1064 = vunpack.c.h.b16 %v770
        %v1065 = vunpack.c.l.b16 %v771
        %v1066 = vunpack.c.l.b16 %v772
        %v1067 = vunpack.c.h.b16 %v772
        %v1068 = vunpack.c.l.b16 %v773
        %v1069 = vunpack.c.l.b16 %v774
        %v1070 = vunpack.c.h.b16 %v774
        %v1071 = vunpack.c.l.b16 %v775
        %v1072 = vunpack.c.l.b16 %v776
        %v1073 = vunpack.c.h.b16 %v776
        %v1074 = vunpack.c.l.b16 %v777
        %v1075 = vunpack.c.l.b16 %v778
        %v1076 = vunpack.c.h.b16 %v778
        %v1077 = vunpack.c.l.b16 %v779
        %v1078 = vunpack.c.l.b16 %v780
        %v1079 = vunpack.c.h.b16 %v780
        %v1080 = vunpack.c.l.b16 %v781
        %v1081 = vunpack.c.l.b16 %v782
        %v1082 = vunpack.c.h.b16 %v782
        %v1083 = vunpack.c.l.b16 %v783
        %v1084 = vunpack.c.l.b16 %v784
        %v1085 = vunpack.c.h.b16 %v784
        %v1086 = vunpack.c.l.b16 %v785
        %v1087 = vunpack.c.l.b16 %v786
        %v1088 = vunpack.c.h.b16 %v786
        %v1089 = vunpack.c.l.b16 %v787
        %v1090 = vunpack.c.l.b16 %v788
        %v1091 = vunpack.c.h.b16 %v788
        %v1092 = vunpack.c.l.b16 %v789
        %v1093 = vunpack.c.l.b16 %v790
        %v1094 = vunpack.c.h.b16 %v790
        %v1095 = vunpack.c.l.b16 %v791
        %v1096 = vunpack.c.l.b16 %v792
        %v1097 = vunpack.c.h.b16 %v792
        %v1098 = vunpack.c.l.b16 %v793
        %v1099 = vunpack.c.l.b16 %v794
        %v1100 = vunpack.c.h.b16 %v794
        %v1101 = vunpack.c.l.b16 %v795
        %v1102 = vunpack.c.l.b16 %v796
        %v1103 = vunpack.c.h.b16 %v796
        %v1104 = vunpack.c.l.b16 %v797
        %v1105 = vunpack.c.l.b16 %v798
        %v1106 = vunpack.c.h.b16 %v798
        %v1107 = vunpack.c.l.b16 %v799
        %v1108 = vunpack.c.l.b16 %v800
        %v1109 = vunpack.c.h.b16 %v800
        %v1110 = vunpack.c.l.b16 %v801
        %v1111 = vunpack.c.l.b16 %v802
        %v1112 = vunpack.c.h.b16 %v802
        %v1113 = vunpack.c.l.b16 %v803
        %v1114 = vunpack.c.l.b16 %v804
        %v1115 = vunpack.c.h.b16 %v804
        %v1116 = vunpack.c.l.b16 %v805
        %v1117 = vunpack.c.l.b16 %v806
        %v1118 = vunpack.c.h.b16 %v806
        %v1119 = vunpack.c.l.b16 %v807
        %v1120 = vunpack.c.l.b16 %v808
        %v1121 = vunpack.c.h.b16 %v808
        %v1122 = vunpack.c.l.b16 %v809
        %v1123 = vunpack.c.l.b16 %v810
        %v1124 = vunpack.c.h.b16 %v810
        %v1125 = vunpack.c.l.b16 %v811
        %v1126 = vunpack.c.l.b16 %v812
        %v1127 = vunpack.c.h.b16 %v812
        %v1128 = vunpack.c.l.b16 %v813
        %v1129 = vunpack.c.l.b16 %v814
        %v1130 = vunpack.c.h.b16 %v814
        %v1131 = vunpack.c.l.b16 %v815
        %v1132 = vunpack.c.l.b16 %v816
        %v1133 = vunpack.c.h.b16 %v816
        %v1134 = vunpack.c.l.b16 %v817
        %v1135 = vunpack.c.l.b16 %v818
        %v1136 = vunpack.c.h.b16 %v818
        %v1137 = vunpack.c.l.b16 %v819
        %v1138 = vunpack.c.l.b16 %v820
        %v1139 = vunpack.c.h.b16 %v820
        %v1140 = vunpack.c.l.b16 %v821
        %v1141 = vunpack.c.l.b16 %v822
        %v1142 = vunpack.c.h.b16 %v822
        %v1143 = vunpack.c.l.b16 %v823
        %v1144 = vpack.c.b16 %v955, %v952
        %v1145 = vpack.c.b16 %v956, %v953
        %v1146 = vpack.c.b16 %v957, %v954
        %v1147 = vpack.c.b16 %v961, %v958
        %v1148 = vpack.c.b16 %v962, %v959
        %v1149 = vpack.c.b16 %v963, %v960
        %v1150 = vpack.c.b16 %v967, %v964
        %v1151 = vpack.c.b16 %v968, %v965
        %v1152 = vpack.c.b16 %v969, %v966
        %v1153 = vpack.c.b16 %v973, %v970
        %v1154 = vpack.c.b16 %v974, %v971
        %v1155 = vpack.c.b16 %v975, %v972
        %v1156 = vpack.c.b16 %v979, %v976
        %v1157 = vpack.c.b16 %v980, %v977
        %v1158 = vpack.c.b16 %v981, %v978
        %v1159 = vpack.c.b16 %v985, %v982
        %v1160 = vpack.c.b16 %v986, %v983
        %v1161 = vpack.c.b16 %v987, %v984
        %v1162 = vpack.c.b16 %v991, %v988
        %v1163 = vpack.c.b16 %v992, %v989
        %v1164 = vpack.c.b16 %v993, %v990
        %v1165 = vpack.c.b16 %v997, %v994
        %v1166 = vpack.c.b16 %v998, %v995
        %v1167 = vpack.c.b16 %v999, %v996
        %v1168 = vpack.c.b16 %v1003, %v1000
        %v1169 = vpack.c.b16 %v1004, %v1001
        %v1170 = vpack.c.b16 %v1005, %v1002
        %v1171 = vpack.c.b16 %v1009, %v1006
        %v1172 = vpack.c.b16 %v1010, %v1007
        %v1173 = vpack.c.b16 %v1011, %v1008
        %v1174 = vpack.c.b16 %v1015, %v1012
        %v1175 = vpack.c.b16 %v1016, %v1013
        %v1176 = vpack.c.b16 %v1017, %v1014
        %v1177 = vpack.c.b16 %v1021, %v1018
        %v1178 = vpack.c.b16 %v1022, %v1019
        %v1179 = vpack.c.b16 %v1023, %v1020
        %v1180 = vpack.c.b16 %v1027, %v1024
        %v1181 = vpack.c.b16 %v1028, %v1025
        %v1182 = vpack.c.b16 %v1029, %v1026
        %v1183 = vpack.c.b16 %v1033, %v1030
        %v1184 = vpack.c.b16 %v1034, %v1031
        %v1185 = vpack.c.b16 %v1035, %v1032
        %v1186 = vpack.c.b16 %v1039, %v1036
        %v1187 = vpack.c.b16 %v1040, %v1037
        %v1188 = vpack.c.b16 %v1041, %v1038
        %v1189 = vpack.c.b16 %v1045, %v1042
        %v1190 = vpack.c.b16 %v1046, %v1043
        %v1191 = vpack.c.b16 %v1047, %v1044
        %v1192 = vpack.c.b16 %v1051, %v1048
        %v1193 = vpack.c.b16 %v1052, %v1049
        %v1194 = vpack.c.b16 %v1053, %v1050
        %v1195 = vpack.c.b16 %v1057, %v1054
        %v1196 = vpack.c.b16 %v1058, %v1055
        %v1197 = vpack.c.b16 %v1059, %v1056
        %v1198 = vpack.c.b16 %v1063, %v1060
        %v1199 = vpack.c.b16 %v1064, %v1061
        %v1200 = vpack.c.b16 %v1065, %v1062
        %v1201 = vpack.c.b16 %v1069, %v1066
        %v1202 = vpack.c.b16 %v1070, %v1067
        %v1203 = vpack.c.b16 %v1071, %v1068
        %v1204 = vpack.c.b16 %v1075, %v1072
        %v1205 = vpack.c.b16 %v1076, %v1073
        %v1206 = vpack.c.b16 %v1077, %v1074
        %v1207 = vpack.c.b16 %v1081, %v1078
        %v1208 = vpack.c.b16 %v1082, %v1079
        %v1209 = vpack.c.b16 %v1083, %v1080
        %v1210 = vpack.c.b16 %v1087, %v1084
        %v1211 = vpack.c.b16 %v1088, %v1085
        %v1212 = vpack.c.b16 %v1089, %v1086
        %v1213 = vpack.c.b16 %v1093, %v1090
        %v1214 = vpack.c.b16 %v1094, %v1091
        %v1215 = vpack.c.b16 %v1095, %v1092
        %v1216 = vpack.c.b16 %v1099, %v1096
        %v1217 = vpack.c.b16 %v1100, %v1097
        %v1218 = vpack.c.b16 %v1101, %v1098
        %v1219 = vpack.c.b16 %v1105, %v1102
        %v1220 = vpack.c.b16 %v1106, %v1103
        %v1221 = vpack.c.b16 %v1107, %v1104
        %v1222 = vpack.c.b16 %v1111, %v1108
        %v1223 = vpack.c.b16 %v1112, %v1109
        %v1224 = vpack.c.b16 %v1113, %v1110
        %v1225 = vpack.c.b16 %v1117, %v1114
        %v1226 = vpack.c.b16 %v1118, %v1115
        %v1227 = vpack.c.b16 %v1119, %v1116
        %v1228 = vpack.c.b16 %v1123, %v1120
        %v1229 = vpack.c.b16 %v1124, %v1121
        %v1230 = vpack.c.b16 %v1125, %v1122
        %v1231 = vpack.c.b16 %v1129, %v1126
        %v1232 = vpack.c.b16 %v1130, %v1127
        %v1233 = vpack.c.b16 %v1131, %v1128
        %v1234 = vpack.c.b16 %v1135, %v1132
        %v1235 = vpack.c.b16 %v1136, %v1133
        %v1236 = vpack.c.b16 %v1137, %v1134
        %v1237 = vpack.c.b16 %v1141, %v1138
        %v1238 = vpack.c.b16 %v1142, %v1139
        %v1239 = vpack.c.b16 %v1143, %v1140
        %1336 = vmatprep.subr.bf16.mxu0 %v1145
        %1337 = vmatpush1.bf16.msra.mxu0 %v1144
        %1338 = vmatprep.subr.bf16.mxu0 %v1148
        %1339 = vmatpush1.bf16.msra.mxu0 %v1147
        %1340 = vmatprep.subr.bf16.mxu0 %v1151
        %1341 = vmatpush1.bf16.msra.mxu0 %v1150
        %1342 = vmatprep.subr.bf16.mxu0 %v1154
        %1343 = vmatpush1.bf16.msra.mxu0 %v1153
        %1344 = vmatprep.subr.bf16.mxu0 %v1157
        %1345 = vmatpush1.bf16.msra.mxu0 %v1156
        %1346 = vmatprep.subr.bf16.mxu0 %v1160
        %1347 = vmatpush1.bf16.msra.mxu0 %v1159
        %1348 = vmatprep.subr.bf16.mxu0 %v1163
        %1349 = vmatpush1.bf16.msra.mxu0 %v1162
        %1350 = vmatprep.subr.bf16.mxu0 %v1166
        %1351 = vmatpush1.bf16.msra.mxu0 %v1165
        %1352 = vmatprep.subr.bf16.mxu0 %v1169
        %1353 = vmatpush1.bf16.msra.mxu0 %v1168
        %1354 = vmatprep.subr.bf16.mxu0 %v1172
        %1355 = vmatpush1.bf16.msra.mxu0 %v1171
        %1356 = vmatprep.subr.bf16.mxu0 %v1175
        %1357 = vmatpush1.bf16.msra.mxu0 %v1174
        %1358 = vmatprep.subr.bf16.mxu0 %v1178
        %1359 = vmatpush1.bf16.msra.mxu0 %v1177
        %1360 = vmatprep.subr.bf16.mxu0 %v1181
        %1361 = vmatpush1.bf16.msra.mxu0 %v1180
        %1362 = vmatprep.subr.bf16.mxu0 %v1184
        %1363 = vmatpush1.bf16.msra.mxu0 %v1183
        %1364 = vmatprep.subr.bf16.mxu0 %v1187
        %1365 = vmatpush1.bf16.msra.mxu0 %v1186
        %1366 = vmatprep.subr.bf16.mxu0 %v1190
        %1367 = vmatpush1.bf16.msra.mxu0 %v1189
        %1368 = vmatprep.mubr.bf16.mxu0 %v693
        %1369 = vmatmul.mubr.bf16.gmra.mrb[0].mxu0 %v692
        %v1370 = vpop.f32.mrb[0].mxu0
        %v1371 = vadd.f32 0.0, %v1370
        %v1372 = vpop.f32.mrb[0].mxu0
        %v1373 = vadd.f32 0.0, %v1372
        %v1374 = vpop.f32.mrb[0].mxu0
        %v1375 = vadd.f32 0.0, %v1374
        %v1376 = vpop.f32.mrb[0].mxu0
        %v1377 = vadd.f32 0.0, %v1376
        %1378 = vdwg.mxu0
        %1379 = vmatprep.subr.bf16.mxu0 %v1193
        %1380 = vmatpush1.bf16.msra.mxu0 %v1192
        %1381 = vmatprep.subr.bf16.mxu0 %v1196
        %1382 = vmatpush1.bf16.msra.mxu0 %v1195
        %1383 = vmatprep.subr.bf16.mxu0 %v1199
        %1384 = vmatpush1.bf16.msra.mxu0 %v1198
        %1385 = vmatprep.subr.bf16.mxu0 %v1202
        %1386 = vmatpush1.bf16.msra.mxu0 %v1201
        %1387 = vmatprep.subr.bf16.mxu0 %v1205
        %1388 = vmatpush1.bf16.msra.mxu0 %v1204
        %1389 = vmatprep.subr.bf16.mxu0 %v1208
        %1390 = vmatpush1.bf16.msra.mxu0 %v1207
        %1391 = vmatprep.subr.bf16.mxu0 %v1211
        %1392 = vmatpush1.bf16.msra.mxu0 %v1210
        %1393 = vmatprep.subr.bf16.mxu0 %v1214
        %1394 = vmatpush1.bf16.msra.mxu0 %v1213
        %1395 = vmatprep.subr.bf16.mxu0 %v1217
        %1396 = vmatpush1.bf16.msra.mxu0 %v1216
        %1397 = vmatprep.subr.bf16.mxu0 %v1220
        %1398 = vmatpush1.bf16.msra.mxu0 %v1219
        %1399 = vmatprep.subr.bf16.mxu0 %v1223
        %1400 = vmatpush1.bf16.msra.mxu0 %v1222
        %1401 = vmatprep.subr.bf16.mxu0 %v1226
        %1402 = vmatpush1.bf16.msra.mxu0 %v1225
        %1403 = vmatprep.subr.bf16.mxu0 %v1229
        %1404 = vmatpush1.bf16.msra.mxu0 %v1228
        %1405 = vmatprep.subr.bf16.mxu0 %v1232
        %1406 = vmatpush1.bf16.msra.mxu0 %v1231
        %1407 = vmatprep.subr.bf16.mxu0 %v1235
        %1408 = vmatpush1.bf16.msra.mxu0 %v1234
        %1409 = vmatprep.subr.bf16.mxu0 %v1238
        %1410 = vmatpush1.bf16.msra.mxu0 %v1237
        %1411 = vmatprep.mubr.bf16.mxu0 %v695
        %1412 = vmatmul.mubr.bf16.gmra.mrb[0].mxu0 %v694
        %v1413 = vpop.f32.mrb[0].mxu0
        %v1414 = vadd.f32 %v1371, %v1413
        %v1415 = vpop.f32.mrb[0].mxu0
        %v1416 = vadd.f32 %v1373, %v1415
        %v1417 = vpop.f32.mrb[0].mxu0
        %v1418 = vadd.f32 %v1375, %v1417
        %v1419 = vpop.f32.mrb[0].mxu0
        %v1420 = vadd.f32 %v1377, %v1419
        %1421 = vdwg.mxu0
        %1422 = vmatprep.subr.bf16.mxu0 0
        %1423 = vmatpush1.bf16.msra.mxu0 %v1146
        %1424 = vmatprep.subr.bf16.mxu0 0
        %1425 = vmatpush1.bf16.msra.mxu0 %v1149
        %1426 = vmatprep.subr.bf16.mxu0 0
        %1427 = vmatpush1.bf16.msra.mxu0 %v1152
        %1428 = vmatprep.subr.bf16.mxu0 0
        %1429 = vmatpush1.bf16.msra.mxu0 %v1155
        %1430 = vmatprep.subr.bf16.mxu0 0
        %1431 = vmatpush1.bf16.msra.mxu0 %v1158
        %1432 = vmatprep.subr.bf16.mxu0 0
        %1433 = vmatpush1.bf16.msra.mxu0 %v1161
        %1434 = vmatprep.subr.bf16.mxu0 0
        %1435 = vmatpush1.bf16.msra.mxu0 %v1164
        %1436 = vmatprep.subr.bf16.mxu0 0
        %1437 = vmatpush1.bf16.msra.mxu0 %v1167
        %1438 = vmatprep.subr.bf16.mxu0 0
        %1439 = vmatpush1.bf16.msra.mxu0 %v1170
        %1440 = vmatprep.subr.bf16.mxu0 0
        %1441 = vmatpush1.bf16.msra.mxu0 %v1173
        %1442 = vmatprep.subr.bf16.mxu0 0
        %1443 = vmatpush1.bf16.msra.mxu0 %v1176
        %1444 = vmatprep.subr.bf16.mxu0 0
        %1445 = vmatpush1.bf16.msra.mxu0 %v1179
        %1446 = vmatprep.subr.bf16.mxu0 0
        %1447 = vmatpush1.bf16.msra.mxu0 %v1182
        %1448 = vmatprep.subr.bf16.mxu0 0
        %1449 = vmatpush1.bf16.msra.mxu0 %v1185
        %1450 = vmatprep.subr.bf16.mxu0 0
        %1451 = vmatpush1.bf16.msra.mxu0 %v1188
        %1452 = vmatprep.subr.bf16.mxu0 0
        %1453 = vmatpush1.bf16.msra.mxu0 %v1191
        %1454 = vmatprep.mubr.bf16.mxu0 %v693
        %1455 = vmatmul.mubr.bf16.gmra.mrb[0].mxu0 %v692
        %v1456 = vpop.f32.mrb[0].mxu0
        %v1457 = vadd.f32 0.0, %v1456
        %v1458 = vpop.f32.mrb[0].mxu0
        %v1459 = vpop.f32.mrb[0].mxu0
        %v1460 = vadd.f32 0.0, %v1459
        %v1461 = vpop.f32.mrb[0].mxu0
        %1462 = vdwg.mxu0
        %1463 = vmatprep.subr.bf16.mxu0 0
        %1464 = vmatpush1.bf16.msra.mxu0 %v1194
        %1465 = vmatprep.subr.bf16.mxu0 0
        %1466 = vmatpush1.bf16.msra.mxu0 %v1197
        %1467 = vmatprep.subr.bf16.mxu0 0
        %1468 = vmatpush1.bf16.msra.mxu0 %v1200
        %1469 = vmatprep.subr.bf16.mxu0 0
        %1470 = vmatpush1.bf16.msra.mxu0 %v1203
        %1471 = vmatprep.subr.bf16.mxu0 0
        %1472 = vmatpush1.bf16.msra.mxu0 %v1206
        %1473 = vmatprep.subr.bf16.mxu0 0
        %1474 = vmatpush1.bf16.msra.mxu0 %v1209
        %1475 = vmatprep.subr.bf16.mxu0 0
        %1476 = vmatpush1.bf16.msra.mxu0 %v1212
        %1477 = vmatprep.subr.bf16.mxu0 0
        %1478 = vmatpush1.bf16.msra.mxu0 %v1215
        %1479 = vmatprep.subr.bf16.mxu0 0
        %1480 = vmatpush1.bf16.msra.mxu0 %v1218
        %1481 = vmatprep.subr.bf16.mxu0 0
        %1482 = vmatpush1.bf16.msra.mxu0 %v1221
        %1483 = vmatprep.subr.bf16.mxu0 0
        %1484 = vmatpush1.bf16.msra.mxu0 %v1224
        %1485 = vmatprep.subr.bf16.mxu0 0
        %1486 = vmatpush1.bf16.msra.mxu0 %v1227
        %1487 = vmatprep.subr.bf16.mxu0 0
        %1488 = vmatpush1.bf16.msra.mxu0 %v1230
        %1489 = vmatprep.subr.bf16.mxu0 0
        %1490 = vmatpush1.bf16.msra.mxu0 %v1233
        %1491 = vmatprep.subr.bf16.mxu0 0
        %1492 = vmatpush1.bf16.msra.mxu0 %v1236
        %1493 = vmatprep.subr.bf16.mxu0 0
        %1494 = vmatpush1.bf16.msra.mxu0 %v1239
        %1495 = vmatprep.mubr.bf16.mxu0 %v695
        %1496 = vmatmul.mubr.bf16.gmra.mrb[0].mxu0 %v694
        %v1497 = vpop.f32.mrb[0].mxu0
        %v1498 = vadd.f32 %v1457, %v1497
        %v1499 = vpop.f32.mrb[0].mxu0
        %v1500 = vpop.f32.mrb[0].mxu0
        %v1501 = vadd.f32 %v1460, %v1500
        %v1502 = vpop.f32.mrb[0].mxu0
        %1503 = vdwg.mxu0
        %v1504 = vpack.c.bf16 %v1418, %v1414
        %v1505 = vpack.c.bf16 %v1420, %v1416
        %v1506 = vpack.c.bf16 %v1501, %v1498
        %v1507 = vld [vmem:[%s4] sm:$0x7]
        %v1510 = vunpack.c.l.s4 1966171168
        %v1511 = vunpack.c.0.s8 %v1510
        %v1512 = vlaneseq
        %v1513 = vshrl.u32 %v1512, 7
        %v1514 = vsub.s32 %v1511, %v1513
        %v1515 = vrot.slane %v1507, %v1514
        %v1516 = vcombine.high %v1515, %v1515
        %v1518 = vunpack.c.l.s4 1966171168
        %v1519 = vunpack.c.0.s8 %v1518
        %v1520 = vlaneseq
        %v1521 = vshrl.u32 %v1520, 7
        %v1522 = vsub.s32 %v1519, %v1521
        %v1523 = vrot.slane %v1515, %v1522
        %v1525 = vunpack.c.l.s4 1966171168
        %v1526 = vunpack.c.0.s8 %v1525
        %v1527 = vlaneseq
        %v1528 = vshrl.u32 %v1527, 7
        %v1529 = vsub.s32 %v1526, %v1528
        %v1530 = vrot.slane %v1516, %v1529
        %v1531 = vcombine.high %v1523, %v1523
        %v1533 = vpack.i.b16 %v1523, %v1523
        %v1535 = vlaneseq
        %v1536 = vshrl.u32 %v1535, 7
        %v1537 = vsub.s32 0, %v1536
        %v1538 = vrot.slane %v1533, %v1537
        %v1540 = vpack.i.b16 %v1530, %v1530
        %v1542 = vlaneseq
        %v1543 = vshrl.u32 %v1542, 7
        %v1544 = vsub.s32 0, %v1543
        %v1545 = vrot.slane %v1540, %v1544
        %v1547 = vpack.i.b16 %v1531, %v1531
        %v1549 = vlaneseq
        %v1550 = vshrl.u32 %v1549, 7
        %v1551 = vsub.s32 0, %v1550
        %v1552 = vrot.slane %v1547, %v1551
        %v1553 = vadd.bf16 %v1504, %v1538
        %v1554 = vadd.bf16 %v1505, %v1545
        %v1555 = vadd.bf16 %v1506, %v1552
        %v1556 = vmax.bf16 %v1553, 0
        %v1557 = vmax.bf16 %v1554, 0
        %v1558 = vmax.bf16 %v1555, 0
        %v1559 = vld [vmem:[#allocation8] sm:$0xf]
        %v1560 = vld [vmem:[#allocation8 + $0x4] sm:$0xf]
        %v1561 = vld [vmem:[#allocation8 + $0x8] sm:$0xf]
        %v1562 = vld [vmem:[#allocation8 + $0xc] sm:$0xf]
        %v1563 = vld [vmem:[#allocation8 + $0x10] sm:$0xf]
        %v1564 = vld [vmem:[#allocation8 + $0x14] sm:$0xf]
        %v1565 = vld [vmem:[#allocation8 + $0x18] sm:$0xf]
        %v1566 = vld [vmem:[#allocation8 + $0x1c] sm:$0xf]
        %v1567 = vld [vmem:[#allocation8 + $0x20] sm:$0xf]
        %v1568 = vld [vmem:[#allocation8 + $0x24] sm:$0xf]
        %v1569 = vld [vmem:[#allocation8 + $0x28] sm:$0xf]
        %v1570 = vld [vmem:[#allocation8 + $0x2c] sm:$0xf]
        %v1571 = vld [vmem:[#allocation8 + $0x30] sm:$0xf]
        %v1572 = vld [vmem:[#allocation8 + $0x34] sm:$0xf]
        %v1573 = vld [vmem:[#allocation8 + $0x38] sm:$0xf]
        %v1574 = vld [vmem:[#allocation8 + $0x3c] sm:$0xf]
        %v1575 = vld [vmem:[#allocation8 + $0x40] sm:$0xf]
        %v1576 = vld [vmem:[#allocation8 + $0x44] sm:$0xf]
        %v1577 = vld [vmem:[#allocation8 + $0x48] sm:$0xf]
        %v1578 = vld [vmem:[#allocation8 + $0x4c] sm:$0xf]
        %v1579 = vld [vmem:[#allocation8 + $0x50] sm:$0xf]
        %v1580 = vld [vmem:[#allocation8 + $0x54] sm:$0xf]
        %v1581 = vld [vmem:[#allocation8 + $0x58] sm:$0xf]
        %v1582 = vld [vmem:[#allocation8 + $0x5c] sm:$0xf]
        %v1583 = vld [vmem:[#allocation8 + $0x60] sm:$0xf]
        %v1584 = vld [vmem:[#allocation8 + $0x64] sm:$0xf]
        %v1585 = vld [vmem:[#allocation8 + $0x68] sm:$0xf]
        %v1586 = vld [vmem:[#allocation8 + $0x6c] sm:$0xf]
        %v1587 = vld [vmem:[#allocation8 + $0x70] sm:$0xf]
        %v1588 = vld [vmem:[#allocation8 + $0x74] sm:$0xf]
        %v1589 = vld [vmem:[#allocation8 + $0x78] sm:$0xf]
        %v1590 = vld [vmem:[#allocation8 + $0x7c] sm:$0xf]
        %v1591 = vld [vmem:[#allocation8 + $0x80] sm:$0xf]
        %v1592 = vld [vmem:[#allocation8 + $0x84] sm:$0xf]
        %v1593 = vld [vmem:[#allocation8 + $0x88] sm:$0xf]
        %v1594 = vld [vmem:[#allocation8 + $0x8c] sm:$0xf]
        %v1595 = vld [vmem:[#allocation8 + $0x90] sm:$0xf]
        %v1596 = vld [vmem:[#allocation8 + $0x94] sm:$0xf]
        %v1597 = vld [vmem:[#allocation8 + $0x98] sm:$0xf]
        %v1598 = vld [vmem:[#allocation8 + $0x9c] sm:$0xf]
        %v1599 = vld [vmem:[#allocation8 + $0xa0] sm:$0xf]
        %v1600 = vld [vmem:[#allocation8 + $0xa4] sm:$0xf]
        %v1601 = vld [vmem:[#allocation8 + $0xa8] sm:$0xf]
        %v1602 = vld [vmem:[#allocation8 + $0xac] sm:$0xf]
        %v1603 = vld [vmem:[#allocation8 + $0xb0] sm:$0xf]
        %v1604 = vld [vmem:[#allocation8 + $0xb4] sm:$0xf]
        %v1605 = vld [vmem:[#allocation8 + $0xb8] sm:$0xf]
        %v1606 = vld [vmem:[#allocation8 + $0xbc] sm:$0xf]
        %v1607 = vld [vmem:[%s6] sm:$0x1]
        %v1609 = vlaneseq
        %v1610 = vshrl.u32 %v1609, 7
        %v1611 = vsub.s32 0, %v1610
        %v1612 = vrot.slane %v1607, %v1611
        %v1662 = vunpack.c.l.b16 %v1559
        %v1663 = vunpack.c.l.b16 %v1560
        %v1664 = vunpack.c.l.b16 %v1561
        %v1665 = vunpack.c.l.b16 %v1562
        %v1666 = vunpack.c.l.b16 %v1563
        %v1667 = vunpack.c.l.b16 %v1564
        %v1668 = vunpack.c.l.b16 %v1565
        %v1669 = vunpack.c.l.b16 %v1566
        %v1670 = vunpack.c.l.b16 %v1567
        %v1671 = vunpack.c.l.b16 %v1568
        %v1672 = vunpack.c.l.b16 %v1569
        %v1673 = vunpack.c.l.b16 %v1570
        %v1674 = vunpack.c.l.b16 %v1571
        %v1675 = vunpack.c.l.b16 %v1572
        %v1676 = vunpack.c.l.b16 %v1573
        %v1677 = vunpack.c.l.b16 %v1574
        %v1678 = vunpack.c.l.b16 %v1575
        %v1679 = vunpack.c.l.b16 %v1576
        %v1680 = vunpack.c.l.b16 %v1577
        %v1681 = vunpack.c.l.b16 %v1578
        %v1682 = vunpack.c.l.b16 %v1579
        %v1683 = vunpack.c.l.b16 %v1580
        %v1684 = vunpack.c.l.b16 %v1581
        %v1685 = vunpack.c.l.b16 %v1582
        %v1686 = vunpack.c.l.b16 %v1583
        %v1687 = vunpack.c.l.b16 %v1584
        %v1688 = vunpack.c.l.b16 %v1585
        %v1689 = vunpack.c.l.b16 %v1586
        %v1690 = vunpack.c.l.b16 %v1587
        %v1691 = vunpack.c.l.b16 %v1588
        %v1692 = vunpack.c.l.b16 %v1589
        %v1693 = vunpack.c.l.b16 %v1590
        %v1694 = vunpack.c.l.b16 %v1591
        %v1695 = vunpack.c.l.b16 %v1592
        %v1696 = vunpack.c.l.b16 %v1593
        %v1697 = vunpack.c.l.b16 %v1594
        %v1698 = vunpack.c.l.b16 %v1595
        %v1699 = vunpack.c.l.b16 %v1596
        %v1700 = vunpack.c.l.b16 %v1597
        %v1701 = vunpack.c.l.b16 %v1598
        %v1702 = vunpack.c.l.b16 %v1599
        %v1703 = vunpack.c.l.b16 %v1600
        %v1704 = vunpack.c.l.b16 %v1601
        %v1705 = vunpack.c.l.b16 %v1602
        %v1706 = vunpack.c.l.b16 %v1603
        %v1707 = vunpack.c.l.b16 %v1604
        %v1708 = vunpack.c.l.b16 %v1605
        %v1709 = vunpack.c.l.b16 %v1606
        %v1710 = vpack.c.b16 %v1663, %v1662
        %v1711 = vpack.c.b16 %v1665, %v1664
        %v1712 = vpack.c.b16 %v1667, %v1666
        %v1713 = vpack.c.b16 %v1669, %v1668
        %v1714 = vpack.c.b16 %v1671, %v1670
        %v1715 = vpack.c.b16 %v1673, %v1672
        %v1716 = vpack.c.b16 %v1675, %v1674
        %v1717 = vpack.c.b16 %v1677, %v1676
        %v1718 = vpack.c.b16 %v1679, %v1678
        %v1719 = vpack.c.b16 %v1681, %v1680
        %v1720 = vpack.c.b16 %v1683, %v1682
        %v1721 = vpack.c.b16 %v1685, %v1684
        %v1722 = vpack.c.b16 %v1687, %v1686
        %v1723 = vpack.c.b16 %v1689, %v1688
        %v1724 = vpack.c.b16 %v1691, %v1690
        %v1725 = vpack.c.b16 %v1693, %v1692
        %v1726 = vpack.c.b16 %v1695, %v1694
        %v1727 = vpack.c.b16 %v1697, %v1696
        %v1728 = vpack.c.b16 %v1699, %v1698
        %v1729 = vpack.c.b16 %v1701, %v1700
        %v1730 = vpack.c.b16 %v1703, %v1702
        %v1731 = vpack.c.b16 %v1705, %v1704
        %v1732 = vpack.c.b16 %v1707, %v1706
        %v1733 = vpack.c.b16 %v1709, %v1708
        %1758 = vmatprep.subr.bf16.mxu0 0
        %1759 = vmatpush1.bf16.msra.mxu0 %v1710
        %1760 = vmatprep.subr.bf16.mxu0 0
        %1761 = vmatpush1.bf16.msra.mxu0 %v1711
        %1762 = vmatprep.subr.bf16.mxu0 0
        %1763 = vmatpush1.bf16.msra.mxu0 %v1712
        %1764 = vmatprep.subr.bf16.mxu0 0
        %1765 = vmatpush1.bf16.msra.mxu0 %v1713
        %1766 = vmatprep.subr.bf16.mxu0 0
        %1767 = vmatpush1.bf16.msra.mxu0 %v1714
        %1768 = vmatprep.subr.bf16.mxu0 0
        %1769 = vmatpush1.bf16.msra.mxu0 %v1715
        %1770 = vmatprep.subr.bf16.mxu0 0
        %1771 = vmatpush1.bf16.msra.mxu0 %v1716
        %1772 = vmatprep.subr.bf16.mxu0 0
        %1773 = vmatpush1.bf16.msra.mxu0 %v1717
        %1774 = vmatprep.subr.bf16.mxu0 0
        %1775 = vmatpush1.bf16.msra.mxu0 %v1718
        %1776 = vmatprep.subr.bf16.mxu0 0
        %1777 = vmatpush1.bf16.msra.mxu0 %v1719
        %1778 = vmatprep.subr.bf16.mxu0 0
        %1779 = vmatpush1.bf16.msra.mxu0 %v1720
        %1780 = vmatprep.subr.bf16.mxu0 0
        %1781 = vmatpush1.bf16.msra.mxu0 %v1721
        %1782 = vmatprep.subr.bf16.mxu0 0
        %1783 = vmatpush1.bf16.msra.mxu0 %v1722
        %1784 = vmatprep.subr.bf16.mxu0 0
        %1785 = vmatpush1.bf16.msra.mxu0 %v1723
        %1786 = vmatprep.subr.bf16.mxu0 0
        %1787 = vmatpush1.bf16.msra.mxu0 %v1724
        %1788 = vmatprep.subr.bf16.mxu0 0
        %1789 = vmatpush1.bf16.msra.mxu0 %v1725
        %1790 = vmatprep.mubr.bf16.mxu0 %v1557
        %1791 = vmatmul.mubr.bf16.gmra.mrb[0].mxu0 %v1556
        %v1792 = vpop.f32.mrb[0].mxu0
        %v1793 = vadd.f32 %v1612, %v1792
        %v1794 = vpop.f32.mrb[0].mxu0
        %v1795 = vpop.f32.mrb[0].mxu0
        %v1796 = vadd.f32 %v1612, %v1795
        %v1797 = vpop.f32.mrb[0].mxu0
        %1798 = vdwg.mxu0
        %1799 = vmatprep.subr.bf16.mxu0 0
        %1800 = vmatpush1.bf16.msra.mxu0 %v1726
        %1801 = vmatprep.subr.bf16.mxu0 0
        %1802 = vmatpush1.bf16.msra.mxu0 %v1727
        %1803 = vmatprep.subr.bf16.mxu0 0
        %1804 = vmatpush1.bf16.msra.mxu0 %v1728
        %1805 = vmatprep.subr.bf16.mxu0 0
        %1806 = vmatpush1.bf16.msra.mxu0 %v1729
        %1807 = vmatprep.subr.bf16.mxu0 0
        %1808 = vmatpush1.bf16.msra.mxu0 %v1730
        %1809 = vmatprep.subr.bf16.mxu0 0
        %1810 = vmatpush1.bf16.msra.mxu0 %v1731
        %1811 = vmatprep.subr.bf16.mxu0 0
        %1812 = vmatpush1.bf16.msra.mxu0 %v1732
        %1813 = vmatprep.subr.bf16.mxu0 0
        %1814 = vmatpush1.bf16.msra.mxu0 %v1733
        %1815 = vmatprep.subr.bf16.mxu0 0
        %1816 = vmatpush1.bf16.msra.mxu0 0
        %1817 = vmatprep.subr.bf16.mxu0 0
        %1818 = vmatpush1.bf16.msra.mxu0 0
        %1819 = vmatprep.subr.bf16.mxu0 0
        %1820 = vmatpush1.bf16.msra.mxu0 0
        %1821 = vmatprep.subr.bf16.mxu0 0
        %1822 = vmatpush1.bf16.msra.mxu0 0
        %1823 = vmatprep.subr.bf16.mxu0 0
        %1824 = vmatpush1.bf16.msra.mxu0 0
        %1825 = vmatprep.subr.bf16.mxu0 0
        %1826 = vmatpush1.bf16.msra.mxu0 0
        %1827 = vmatprep.subr.bf16.mxu0 0
        %1828 = vmatpush1.bf16.msra.mxu0 0
        %1829 = vmatprep.subr.bf16.mxu0 0
        %1830 = vmatpush1.bf16.msra.mxu0 0
        %1831 = vmatprep.mubr.bf16.mxu0 0
        %1832 = vmatmul.mubr.bf16.gmra.mrb[0].mxu0 %v1558
        %v1833 = vpop.f32.mrb[0].mxu0
        %v1834 = vadd.f32 %v1793, %v1833
        %v1835 = vpop.f32.mrb[0].mxu0
        %v1836 = vpop.f32.mrb[0].mxu0
        %v1837 = vadd.f32 %v1796, %v1836
        %v1838 = vpop.f32.mrb[0].mxu0
        %1839 = vdwg.mxu0
        %v1840 = vtanh.pop %v1834
        %v1841 = vtanh.pop %v1837
        %1842 = vst [vmem:[%s340] sm:$0xff] %v1840
        %1843 = vst [vmem:[%s340 + $0x8] sm:$0xff] %v1841
        %s1844 = sand.u32 %s186, 1
        %s1845 = scalar_lea.sflag [#allocation4], %s1844
        %s1846 = sand.u32 %s186, 1
        %s1847 = smul.addr %s1846, 16
        %s1848 = scalar_lea.vmem [#allocation10], %s1847
        // Predicated region
        $region65: #{tpu_custom_call.1} parent=47 // pred_check
          %p1849 = pneg %p196
        $region66: #{tpu_custom_call.1} parent=47 // pred_check_branch
          %1851 = sbr.rel (%p1849) target = $region68
        $region67: #{tpu_custom_call.1} parent=47 // pred_region
          %s1852 = smul.u32 2, %s26
          %s1854 = ssub.s32 256, 256
          %1855 = vsyncadd %s1845, %s1854
          %s1856 = smul.addr %s1852, 128
          %s1857 = scalar_lea.hbm %s7, %s1856
          %s1858 = sshll.u32 %s1848, 4
          %s1859 = int_to_ptr.vmem [resolvable:$true] %s1858
          %1864 = dma.vmem_to_hbm [thread:$0]  %s1859, 256, %s1857, %s1845, 128, 128, 8
        $region68: #{tpu_custom_call.1} parent=47 // pred_fallthru
          _
      $region48: #{tpu_custom_call.1} parent=5 // pred_fallthru
        _
      %p1865 = scmp.le.s32.totalorder 2, %s21
      // Predicated region
      $region69: #{tpu_custom_call.1} parent=5 // pred_check
        %p1866 = pneg %p1865
      $region70: #{tpu_custom_call.1} parent=5 // pred_check_branch
        %1868 = sbr.rel (%p1866) target = $region72
      $region71: #{tpu_custom_call.1} parent=5 // pred_region
        %s1869 = ssub.s32 %s21, 2
        // Predicated region
        $region73: #{tpu_custom_call.1} parent=71 // pred_check
          %p1870 = pneg %p202
        $region74: #{tpu_custom_call.1} parent=71 // pred_check_branch
          %1872 = sbr.rel (%p1870) target = $region76
        $region75: #{tpu_custom_call.1} parent=71 // pred_region
          %s1873 = sand.u32 %s187, 1
          %s1874 = scalar_lea.sflag [#allocation4], %s1873
          %s1875 = sand.u32 %s187, 1
          %s1876 = smul.addr %s1875, 16
          %s1877 = scalar_lea.vmem [#allocation10], %s1876
          %1878 = dma.done %s1874, 256
        $region76: #{tpu_custom_call.1} parent=71 // pred_fallthru
          _
      $region72: #{tpu_custom_call.1} parent=5 // pred_fallthru
        _
    $region6: #{tpu_custom_call.1} parent=1 // loop_footer
      %s25 = sadd.s32 1, %s21
    $region7: #{tpu_custom_call.1} parent=1 // loop_footer_branch
      %20 = sbr.rel target = $region3
    $region8: #{tpu_custom_call.1} parent=1 // loop_exit
      _
    %1879 = vsyncpa [#allocation3], 1
    %s1880 = scalar_lea.sflag [#allocation3], 1
    %1881 = vsyncpa %s1880, 1
    %1882 = vsyncpa [#allocation6], 1
    %1883 = vsyncpa [#allocation9], 1
    %1884 = vsyncpa [#allocation4], 1
    %s1885 = scalar_lea.sflag [#allocation4], 1
    %1886 = vsyncpa %s1885, 1

</llo_original>
